<compile_context>
chip_gen: v7x
topology: tpu7x:2x2x1
jax: 0.10.0
libtpu: 0.0.40
codegen_flags: <defaults>
</compile_context>

<pallas_src>
import jax
import jax.numpy as jnp
from jax.experimental import pallas as pl
from jax.experimental.pallas import tpu as pltpu


def _nerf_kernel(xin_ref,                      # (TN, 12)  [pos | view | light | base_colors]
                 w_in_ref, b1_ref,             # (12, 2H) block-diag, (1, H)
                 w2_ref, b2_ref,               # (H, H), (1, H)
                 w3a_ref, b3_ref,              # (H, H), (1, H)
                 w4_ref, b4_ref,               # (H, H), (1, H)
                 w5_ref, b5_ref,               # (H, 128) padded, (1, 128) padded
                 out_ref):                     # (TN, 128) padded output
    H = b1_ref.shape[-1]
    bf16 = jnp.bfloat16

    x = xin_ref[...].astype(bf16)              # (TN, 12)

    # Fused first MXU pass: columns [0:H] = x @ W1, columns [H:2H] = bc @ W3_bot.
    t = jnp.dot(x, w_in_ref[...], preferred_element_type=jnp.float32)  # (TN, 2H)
    h = jnp.maximum(t[:, :H] + b1_ref[...], 0.0)                       # encoder L1
    bc_proj = t[:, H:]                                                 # bc @ W3_bot

    # Encoder layer 2: Linear(H, H) + ReLU
    h = jnp.dot(h.astype(bf16), w2_ref[...],
                preferred_element_type=jnp.float32) + b2_ref[...]
    h = jnp.maximum(h, 0.0)

    # Color network layer 1: Linear(H+3, H) on concat([h, bc]) + ReLU
    #   = h @ W3_top + bc @ W3_bot + b3   (bc part already computed above)
    c = (jnp.dot(h.astype(bf16), w3a_ref[...],
                 preferred_element_type=jnp.float32) + bc_proj + b3_ref[...])
    c = jnp.maximum(c, 0.0)

    # Color network layer 2: Linear(H, H) + ReLU
    c = jnp.dot(c.astype(bf16), w4_ref[...],
                preferred_element_type=jnp.float32) + b4_ref[...]
    c = jnp.maximum(c, 0.0)

    # Color network layer 3: Linear(H, 3) + Sigmoid (lane-padded to 128)
    o = jnp.dot(c.astype(bf16), w5_ref[...],
                preferred_element_type=jnp.float32) + b5_ref[...]
    out_ref[...] = jax.nn.sigmoid(o).astype(out_ref.dtype)


def object_reflectance_nerf(positions, view_dirs, light_dirs, base_colors,
                            params, *, tile_n=512):
    """Forward pass. All inputs are (N, 3) float32; returns (N, 3) float32."""
    N = positions.shape[0]
    H = params["w1"].shape[1]
    assert H % 128 == 0, "hidden_dim must be a multiple of 128 (module default 256 is fine)"

    # Pack all per-ray inputs once: (N, 12) = [pos | view | light | base_colors].
    xin = jnp.concatenate([positions, view_dirs, light_dirs, base_colors], axis=1)

    # Ragged-safe batch: pad rows up to a multiple of tile_n, slice result back.
    n_blocks = pl.cdiv(N, tile_n)
    n_pad = n_blocks * tile_n
    if n_pad != N:
        xin = jnp.pad(xin, ((0, n_pad - N), (0, 0)))

    # Split W3 into the feature part (top H rows) and base-color part (bottom 3).
    w3 = params["w3"]                       # (H+3, H)
    w3a, w3b = w3[:H, :], w3[H:, :]

    # Block-diagonal fused first-layer weight: (12, 2H).
    w_in = jnp.zeros((12, 2 * H), jnp.float32)
    w_in = w_in.at[0:9, 0:H].set(params["w1"])
    w_in = w_in.at[9:12, H:2 * H].set(w3b)

    # Final projection padded to 128 lanes (lane-dense last MXU pass + store).
    w5p = jnp.zeros((H, 128), jnp.float32).at[:, :3].set(params["w5"])
    b5p = jnp.zeros((1, 128), jnp.float32).at[:, :3].set(params["b5"])

    # Weights in bf16 (f32 accumulation happens in-kernel); biases stay f32.
    bf16 = jnp.bfloat16
    w_in = w_in.astype(bf16)
    w2 = params["w2"].astype(bf16)
    w3a = w3a.astype(bf16)
    w4 = params["w4"].astype(bf16)
    w5p = w5p.astype(bf16)

    b1 = params["b1"].reshape(1, H)
    b2 = params["b2"].reshape(1, H)
    b3 = params["b3"].reshape(1, H)
    b4 = params["b4"].reshape(1, H)

    def batch_spec(feat):
        return pl.BlockSpec((tile_n, feat), lambda i: (i, 0))

    def resident_spec(shape):
        # Constant index_map -> fetched once, stays VMEM-resident across the grid.
        return pl.BlockSpec(shape, lambda i: (0, 0))

    out = pl.pallas_call(
        _nerf_kernel,
        out_shape=jax.ShapeDtypeStruct((n_pad, 128), jnp.float32),
        grid_spec=pltpu.PrefetchScalarGridSpec(
            num_scalar_prefetch=0,
            grid=(n_blocks,),
            in_specs=[
                batch_spec(12),                                   # xin
                resident_spec(w_in.shape), resident_spec(b1.shape),
                resident_spec(w2.shape), resident_spec(b2.shape),
                resident_spec(w3a.shape), resident_spec(b3.shape),
                resident_spec(w4.shape), resident_spec(b4.shape),
                resident_spec(w5p.shape), resident_spec(b5p.shape),
            ],
            out_specs=batch_spec(128),
        ),
        compiler_params=pltpu.CompilerParams(
            dimension_semantics=("parallel",)),
    )(xin, w_in, b1, w2, b2, w3a, b3, w4, b4, w5p, b5p)

    return out[:N, :3]


def init_params(key, hidden_dim=128):
    """Deterministic synthetic parameters matching the PyTorch module shapes
    (stored as (in_features, out_features) so the kernel does x @ W + b)."""
    H = hidden_dim
    ks = jax.random.split(key, 10)

    def lin(kw, kb, fan_in, fan_out):
        bound = 1.0 / jnp.sqrt(fan_in)
        w = jax.random.uniform(kw, (fan_in, fan_out), jnp.float32, -bound, bound)
        b = jax.random.uniform(kb, (fan_out,), jnp.float32, -bound, bound)
        return w, b

    p = {}
    p["w1"], p["b1"] = lin(ks[0], ks[1], 9, H)
    p["w2"], p["b2"] = lin(ks[2], ks[3], H, H)
    p["w3"], p["b3"] = lin(ks[4], ks[5], H + 3, H)
    p["w4"], p["b4"] = lin(ks[6], ks[7], H, H)
    p["w5"], p["b5"] = lin(ks[8], ks[9], H, 3)
    return p


def _reference_forward(positions, view_dirs, light_dirs, base_colors, params):
    x = jnp.concatenate([positions, view_dirs, light_dirs], axis=1)
    h = jax.nn.relu(x @ params["w1"] + params["b1"])
    h = jax.nn.relu(h @ params["w2"] + params["b2"])
    c = jnp.concatenate([h, base_colors], axis=1)
    c = jax.nn.relu(c @ params["w3"] + params["b3"])
    c = jax.nn.relu(c @ params["w4"] + params["b4"])
    return jax.nn.sigmoid(c @ params["w5"] + params["b5"])


if __name__ == "__main__":
    key = jax.random.PRNGKey(0)
    k_pos, k_view, k_light, k_col, k_par = jax.random.split(key, 5)

    N = 300           # deliberately ragged to exercise the padded cdiv grid
    HIDDEN = 128      # module default is 256; kept small for the demo

    positions = jax.random.normal(k_pos, (N, 3), jnp.float32)
    view_dirs = jax.random.normal(k_view, (N, 3), jnp.float32)
    light_dirs = jax.random.normal(k_light, (N, 3), jnp.float32)
    base_colors = jax.random.uniform(k_col, (N, 3), jnp.float32)

    params = init_params(k_par, hidden_dim=HIDDEN)

    out = object_reflectance_nerf(positions, view_dirs, light_dirs,
                                  base_colors, params, tile_n=256)
    out = jax.block_until_ready(out)

    ref = _reference_forward(positions, view_dirs, light_dirs,
                             base_colors, params)
    assert out.shape == (N, 3)
    max_err = float(jnp.max(jnp.abs(out - ref)))
    # bf16 matmuls with f32 accumulation: loosen tolerance vs the pure-f32 ref.
    assert max_err < 2e-2, f"max abs error {max_err}"

    print("KERNEL_OK")
</pallas_src>

<mosaic_0001>
module attributes {stable_mosaic.version = 11 : i64} {
  func.func @_nerf_kernel(%arg0: i32, %arg1: memref<256x12xf32, #tpu.memory_space<vmem>>, %arg2: memref<12x256xbf16, #tpu.memory_space<vmem>>, %arg3: memref<1x128xf32, #tpu.memory_space<vmem>>, %arg4: memref<128x128xbf16, #tpu.memory_space<vmem>>, %arg5: memref<1x128xf32, #tpu.memory_space<vmem>>, %arg6: memref<128x128xbf16, #tpu.memory_space<vmem>>, %arg7: memref<1x128xf32, #tpu.memory_space<vmem>>, %arg8: memref<128x128xbf16, #tpu.memory_space<vmem>>, %arg9: memref<1x128xf32, #tpu.memory_space<vmem>>, %arg10: memref<128x128xbf16, #tpu.memory_space<vmem>>, %arg11: memref<1x128xf32, #tpu.memory_space<vmem>>, %arg12: memref<256x128xf32, #tpu.memory_space<vmem>>) attributes {dimension_semantics = [#tpu.dimension_semantics<parallel>], iteration_bounds = array<i64: 2>, scalar_prefetch = 0 : i64, scratch_operands = 0 : i64, tpu.core_type = #tpu.core_type<tc>, window_params = [{transform_indices = @transform_0, window_bounds = array<i64: 256, 12>}, {pipeline_mode = #tpu.pipeline_mode<synchronous>, transform_indices = @transform_1, window_bounds = array<i64: 12, 256>}, {pipeline_mode = #tpu.pipeline_mode<synchronous>, transform_indices = @transform_2, window_bounds = array<i64: 1, 128>}, {pipeline_mode = #tpu.pipeline_mode<synchronous>, transform_indices = @transform_3, window_bounds = array<i64: 128, 128>}, {pipeline_mode = #tpu.pipeline_mode<synchronous>, transform_indices = @transform_4, window_bounds = array<i64: 1, 128>}, {pipeline_mode = #tpu.pipeline_mode<synchronous>, transform_indices = @transform_5, window_bounds = array<i64: 128, 128>}, {pipeline_mode = #tpu.pipeline_mode<synchronous>, transform_indices = @transform_6, window_bounds = array<i64: 1, 128>}, {pipeline_mode = #tpu.pipeline_mode<synchronous>, transform_indices = @transform_7, window_bounds = array<i64: 128, 128>}, {pipeline_mode = #tpu.pipeline_mode<synchronous>, transform_indices = @transform_8, window_bounds = array<i64: 1, 128>}, {pipeline_mode = #tpu.pipeline_mode<synchronous>, transform_indices = @transform_9, window_bounds = array<i64: 128, 128>}, {pipeline_mode = #tpu.pipeline_mode<synchronous>, transform_indices = @transform_10, window_bounds = array<i64: 1, 128>}, {transform_indices = @transform_11, window_bounds = array<i64: 256, 128>}]} {
    %c0 = arith.constant 0 : index
    %c0_0 = arith.constant 0 : index
    %0 = vector.load %arg1[%c0, %c0_0] : memref<256x12xf32, #tpu.memory_space<vmem>>, vector<256x12xf32>
    %1 = arith.truncf %0 : vector<256x12xf32> to vector<256x12xbf16>
    %c0_1 = arith.constant 0 : index
    %c0_2 = arith.constant 0 : index
    %2 = vector.load %arg2[%c0_1, %c0_2] : memref<12x256xbf16, #tpu.memory_space<vmem>>, vector<12x256xbf16>
    %cst = arith.constant dense<0.000000e+00> : vector<256x256xf32>
    %3 = tpu.matmul %1, %2, %cst {dimension_numbers = #tpu.dot_dimension_numbers<[1], [0], [0], [1], [0, 0, 1, 1], [], []>} : vector<256x12xbf16>, vector<12x256xbf16>, vector<256x256xf32> -> vector<256x256xf32>
    %4 = vector.extract_strided_slice %3 {offsets = [0, 0], sizes = [256, 128], strides = [1, 1]} : vector<256x256xf32> to vector<256x128xf32>
    %c0_3 = arith.constant 0 : index
    %c0_4 = arith.constant 0 : index
    %5 = vector.load %arg3[%c0_3, %c0_4] : memref<1x128xf32, #tpu.memory_space<vmem>>, vector<1x128xf32>
    %6 = vector.broadcast %5 : vector<1x128xf32> to vector<256x128xf32>
    %7 = arith.addf %4, %6 : vector<256x128xf32>
    %cst_5 = arith.constant 0.000000e+00 : f32
    %8 = vector.broadcast %cst_5 : f32 to vector<256x128xf32>
    %9 = arith.maximumf %7, %8 : vector<256x128xf32>
    %10 = vector.extract_strided_slice %3 {offsets = [0, 128], sizes = [256, 128], strides = [1, 1]} : vector<256x256xf32> to vector<256x128xf32>
    %11 = arith.truncf %9 : vector<256x128xf32> to vector<256x128xbf16>
    %c0_6 = arith.constant 0 : index
    %c0_7 = arith.constant 0 : index
    %12 = vector.load %arg4[%c0_6, %c0_7] : memref<128x128xbf16, #tpu.memory_space<vmem>>, vector<128x128xbf16>
    %cst_8 = arith.constant dense<0.000000e+00> : vector<256x128xf32>
    %13 = tpu.matmul %11, %12, %cst_8 {dimension_numbers = #tpu.dot_dimension_numbers<[1], [0], [0], [1], [0, 0, 1, 1], [], []>} : vector<256x128xbf16>, vector<128x128xbf16>, vector<256x128xf32> -> vector<256x128xf32>
    %c0_9 = arith.constant 0 : index
    %c0_10 = arith.constant 0 : index
    %14 = vector.load %arg5[%c0_9, %c0_10] : memref<1x128xf32, #tpu.memory_space<vmem>>, vector<1x128xf32>
    %15 = vector.broadcast %14 : vector<1x128xf32> to vector<256x128xf32>
    %16 = arith.addf %13, %15 : vector<256x128xf32>
    %cst_11 = arith.constant 0.000000e+00 : f32
    %17 = vector.broadcast %cst_11 : f32 to vector<256x128xf32>
    %18 = arith.maximumf %16, %17 : vector<256x128xf32>
    %19 = arith.truncf %18 : vector<256x128xf32> to vector<256x128xbf16>
    %c0_12 = arith.constant 0 : index
    %c0_13 = arith.constant 0 : index
    %20 = vector.load %arg6[%c0_12, %c0_13] : memref<128x128xbf16, #tpu.memory_space<vmem>>, vector<128x128xbf16>
    %cst_14 = arith.constant dense<0.000000e+00> : vector<256x128xf32>
    %21 = tpu.matmul %19, %20, %cst_14 {dimension_numbers = #tpu.dot_dimension_numbers<[1], [0], [0], [1], [0, 0, 1, 1], [], []>} : vector<256x128xbf16>, vector<128x128xbf16>, vector<256x128xf32> -> vector<256x128xf32>
    %22 = arith.addf %21, %10 : vector<256x128xf32>
    %c0_15 = arith.constant 0 : index
    %c0_16 = arith.constant 0 : index
    %23 = vector.load %arg7[%c0_15, %c0_16] : memref<1x128xf32, #tpu.memory_space<vmem>>, vector<1x128xf32>
    %24 = vector.broadcast %23 : vector<1x128xf32> to vector<256x128xf32>
    %25 = arith.addf %22, %24 : vector<256x128xf32>
    %cst_17 = arith.constant 0.000000e+00 : f32
    %26 = vector.broadcast %cst_17 : f32 to vector<256x128xf32>
    %27 = arith.maximumf %25, %26 : vector<256x128xf32>
    %28 = arith.truncf %27 : vector<256x128xf32> to vector<256x128xbf16>
    %c0_18 = arith.constant 0 : index
    %c0_19 = arith.constant 0 : index
    %29 = vector.load %arg8[%c0_18, %c0_19] : memref<128x128xbf16, #tpu.memory_space<vmem>>, vector<128x128xbf16>
    %cst_20 = arith.constant dense<0.000000e+00> : vector<256x128xf32>
    %30 = tpu.matmul %28, %29, %cst_20 {dimension_numbers = #tpu.dot_dimension_numbers<[1], [0], [0], [1], [0, 0, 1, 1], [], []>} : vector<256x128xbf16>, vector<128x128xbf16>, vector<256x128xf32> -> vector<256x128xf32>
    %c0_21 = arith.constant 0 : index
    %c0_22 = arith.constant 0 : index
    %31 = vector.load %arg9[%c0_21, %c0_22] : memref<1x128xf32, #tpu.memory_space<vmem>>, vector<1x128xf32>
    %32 = vector.broadcast %31 : vector<1x128xf32> to vector<256x128xf32>
    %33 = arith.addf %30, %32 : vector<256x128xf32>
    %cst_23 = arith.constant 0.000000e+00 : f32
    %34 = vector.broadcast %cst_23 : f32 to vector<256x128xf32>
    %35 = arith.maximumf %33, %34 : vector<256x128xf32>
    %36 = arith.truncf %35 : vector<256x128xf32> to vector<256x128xbf16>
    %c0_24 = arith.constant 0 : index
    %c0_25 = arith.constant 0 : index
    %37 = vector.load %arg10[%c0_24, %c0_25] : memref<128x128xbf16, #tpu.memory_space<vmem>>, vector<128x128xbf16>
    %cst_26 = arith.constant dense<0.000000e+00> : vector<256x128xf32>
    %38 = tpu.matmul %36, %37, %cst_26 {dimension_numbers = #tpu.dot_dimension_numbers<[1], [0], [0], [1], [0, 0, 1, 1], [], []>} : vector<256x128xbf16>, vector<128x128xbf16>, vector<256x128xf32> -> vector<256x128xf32>
    %c0_27 = arith.constant 0 : index
    %c0_28 = arith.constant 0 : index
    %39 = vector.load %arg11[%c0_27, %c0_28] : memref<1x128xf32, #tpu.memory_space<vmem>>, vector<1x128xf32>
    %40 = vector.broadcast %39 : vector<1x128xf32> to vector<256x128xf32>
    %41 = arith.addf %38, %40 : vector<256x128xf32>
    %42 = arith.negf %41 : vector<256x128xf32>
    %43 = math.exp %42 : vector<256x128xf32>
    %cst_29 = arith.constant 1.000000e+00 : f32
    %44 = vector.broadcast %cst_29 : f32 to vector<256x128xf32>
    %45 = arith.addf %44, %43 : vector<256x128xf32>
    %46 = arith.divf %44, %45 : vector<256x128xf32>
    %c0_30 = arith.constant 0 : index
    %c0_31 = arith.constant 0 : index
    %47 = vector.load %arg12[%c0_30, %c0_31] : memref<256x128xf32, #tpu.memory_space<vmem>>, vector<256x128xf32>
    tpu.vector_store %arg12[%c0_30, %c0_31], %46 {strides = array<i32>} : memref<256x128xf32, #tpu.memory_space<vmem>>, vector<256x128xf32>,
    return
  }
  func.func @transform_0(%arg0: i32) -> (i32, i32) {
    %c0_i32 = arith.constant 0 : i32
    %c0_i32_0 = arith.constant 0 : i32
    return %arg0, %c0_i32 : i32, i32
  }
  func.func @transform_1(%arg0: i32) -> (i32, i32) {
    %c0_i32 = arith.constant 0 : i32
    %c0_i32_0 = arith.constant 0 : i32
    %c0_i32_1 = arith.constant 0 : i32
    return %c0_i32, %c0_i32_0 : i32, i32
  }
  func.func @transform_2(%arg0: i32) -> (i32, i32) {
    %c0_i32 = arith.constant 0 : i32
    %c0_i32_0 = arith.constant 0 : i32
    %c0_i32_1 = arith.constant 0 : i32
    return %c0_i32, %c0_i32_0 : i32, i32
  }
  func.func @transform_3(%arg0: i32) -> (i32, i32) {
    %c0_i32 = arith.constant 0 : i32
    %c0_i32_0 = arith.constant 0 : i32
    %c0_i32_1 = arith.constant 0 : i32
    return %c0_i32, %c0_i32_0 : i32, i32
  }
  func.func @transform_4(%arg0: i32) -> (i32, i32) {
    %c0_i32 = arith.constant 0 : i32
    %c0_i32_0 = arith.constant 0 : i32
    %c0_i32_1 = arith.constant 0 : i32
    return %c0_i32, %c0_i32_0 : i32, i32
  }
  func.func @transform_5(%arg0: i32) -> (i32, i32) {
    %c0_i32 = arith.constant 0 : i32
    %c0_i32_0 = arith.constant 0 : i32
    %c0_i32_1 = arith.constant 0 : i32
    return %c0_i32, %c0_i32_0 : i32, i32
  }
  func.func @transform_6(%arg0: i32) -> (i32, i32) {
    %c0_i32 = arith.constant 0 : i32
    %c0_i32_0 = arith.constant 0 : i32
    %c0_i32_1 = arith.constant 0 : i32
    return %c0_i32, %c0_i32_0 : i32, i32
  }
  func.func @transform_7(%arg0: i32) -> (i32, i32) {
    %c0_i32 = arith.constant 0 : i32
    %c0_i32_0 = arith.constant 0 : i32
    %c0_i32_1 = arith.constant 0 : i32
    return %c0_i32, %c0_i32_0 : i32, i32
  }
  func.func @transform_8(%arg0: i32) -> (i32, i32) {
    %c0_i32 = arith.constant 0 : i32
    %c0_i32_0 = arith.constant 0 : i32
    %c0_i32_1 = arith.constant 0 : i32
    return %c0_i32, %c0_i32_0 : i32, i32
  }
  func.func @transform_9(%arg0: i32) -> (i32, i32) {
    %c0_i32 = arith.constant 0 : i32
    %c0_i32_0 = arith.constant 0 : i32
    %c0_i32_1 = arith.constant 0 : i32
    return %c0_i32, %c0_i32_0 : i32, i32
  }
  func.func @transform_10(%arg0: i32) -> (i32, i32) {
    %c0_i32 = arith.constant 0 : i32
    %c0_i32_0 = arith.constant 0 : i32
    %c0_i32_1 = arith.constant 0 : i32
    return %c0_i32, %c0_i32_0 : i32, i32
  }
  func.func @transform_11(%arg0: i32) -> (i32, i32) {
    %c0_i32 = arith.constant 0 : i32
    %c0_i32_0 = arith.constant 0 : i32
    return %arg0, %c0_i32 : i32, i32
  }
}

</mosaic_0001>

<llo_original>
// kernel: tpu_custom_call.1
$region0: #{tpu_custom_call.1}
  #allocation0 [shape = 'u32[]', space=smem, size = 0x4, offset = 0x4, fixed_abs, tag = 'smem constant byte address 0x4 - core index']
  #allocation1 [shape = 'u32[144,128]{1,0:T(1,128)}', space=vmem, size = 0x12000, scoped, tag = 'internal scratch']
  %s0 = inlined_call_operand.vmem [shape: f32[512,12], index: 0, kind: input, shape index: {}]
  %s1 = inlined_call_operand.vmem [shape: bf16[12,256], index: 1, kind: input, shape index: {}]
  %s2 = inlined_call_operand.vmem [shape: f32[1,128], index: 2, kind: input, shape index: {}]
  %s3 = inlined_call_operand.vmem [shape: bf16[128,128], index: 3, kind: input, shape index: {}]
  %s4 = inlined_call_operand.vmem [shape: f32[1,128], index: 4, kind: input, shape index: {}]
  %s5 = inlined_call_operand.vmem [shape: bf16[128,128], index: 5, kind: input, shape index: {}]
  %s6 = inlined_call_operand.vmem [shape: f32[1,128], index: 6, kind: input, shape index: {}]
  %s7 = inlined_call_operand.vmem [shape: bf16[128,128], index: 7, kind: input, shape index: {}]
  %s8 = inlined_call_operand.vmem [shape: f32[1,128], index: 8, kind: input, shape index: {}]
  %s9 = inlined_call_operand.vmem [shape: bf16[128,128], index: 9, kind: input, shape index: {}]
  %s10 = inlined_call_operand.vmem [shape: f32[1,128], index: 10, kind: input, shape index: {}]
  %s11 = inlined_call_operand.hbm [shape: f32[512,128], index: 11, kind: output, shape index: {}]
  %s12 = sld [smem:[#allocation0]]
  $region77: #{tpu_custom_call.1} parent=0
    _
  %s14 = ssub.s32 1, %s12
  %s15 = scalar_select 0, %s14, %s12
  $region1: #{tpu_custom_call.1} parent=0
    #allocation2 [shape = 'u8[262144]{0}', space=vmem, size = 0x40000, scoped, tag = 'output window, operand 0']
    #allocation3 [shape = 's32[2]{0}', space=sflag, size = 0x8, scoped, tag = 'scoped memory for tpu_custom_call.1']
    %16 = vsyncpa [#allocation3], 0
    %s17 = scalar_lea.sflag [#allocation3], 1
    %18 = vsyncpa %s17, 0
    loop: start=0, step=1, limit=4
    $region2: #{tpu_custom_call.1} parent=1 // loop_pre_header
      _
    $region3: #{tpu_custom_call.1} parent=1 // loop_header
      %s20 = sphi 0, %s24
      %p21 = scmp.ge.s32.totalorder %s20, 4
      %s30 = sphi 0, %s32
      %s33 = sphi 0, %s30
      %s34 = sphi 0, %s33
      %s50 = sphi 0, %s34
      %s54 = sphi 0, %s54
      %s56 = sphi 0, %s54
      %s57 = sphi 0, %s56
      %s71 = sphi 0, %s57
      %s75 = sphi 0, %s75
      %s77 = sphi 0, %s75
      %s78 = sphi 0, %s77
      %s92 = sphi 0, %s78
      %s96 = sphi 0, %s96
      %s98 = sphi 0, %s96
      %s99 = sphi 0, %s98
      %s113 = sphi 0, %s99
      %s117 = sphi 0, %s117
      %s119 = sphi 0, %s117
      %s120 = sphi 0, %s119
      %s134 = sphi 0, %s120
      %s138 = sphi 0, %s138
      %s140 = sphi 0, %s138
      %s141 = sphi 0, %s140
      %s155 = sphi 0, %s141
      %s159 = sphi 0, %s159
      %s161 = sphi 0, %s159
      %s162 = sphi 0, %s161
      %s176 = sphi 0, %s162
      %s180 = sphi 0, %s180
      %s182 = sphi 0, %s180
      %s183 = sphi 0, %s182
      %s197 = sphi 0, %s183
      %s201 = sphi 0, %s201
      %s203 = sphi 0, %s201
      %s204 = sphi 0, %s203
      %s218 = sphi 0, %s204
      %s222 = sphi 0, %s222
      %s224 = sphi 0, %s222
      %s225 = sphi 0, %s224
      %s239 = sphi 0, %s225
      %s243 = sphi 0, %s243
      %s245 = sphi 0, %s243
      %s246 = sphi 0, %s245
      %s260 = sphi 0, %s246
      %s266 = sphi 0, %s268
      %s269 = sphi 0, %s266
      %s270 = sphi 0, %s269
      %s286 = sphi 0, %s270
    $region4: #{tpu_custom_call.1} parent=1 // loop_header_branch
      %23 = sbr.rel (%p21) target = $region8
    $region5: #{tpu_custom_call.1} parent=1 // loop_body
      %s25 = ssub.s32 %s20, 1
      %s26 = ssub.s32 %s20, 2
      %s27 = sadd.s32 %s20, 1
      %s28 = ssub.s32 %s20, %s27
      %p29 = scmp.eq.s32.totalorder %s28, 0
      %s31 = sadd.s32 %s30, 1
      %s32 = scalar_select %p29, %s30, %s31
      %p35 = pneg %p29
      %p36 = scmp.eq.s32.totalorder %s20, 1
      %p37 = por %p35, %p36
      %p38 = scmp.ne.s32.totalorder %s30, %s33
      %p39 = scmp.eq.s32.totalorder %s20, 0
      %p40 = por %p38, %p39
      %p41 = scmp.ne.s32.totalorder %s30, %s33
      %p42 = scmp.eq.s32.totalorder %s25, 1
      %p43 = por %p41, %p42
      %p44 = scmp.ne.s32.totalorder %s33, %s34
      %p45 = scmp.eq.s32.totalorder %s25, 0
      %p46 = por %p44, %p45
      %p47 = scmp.ne.s32.totalorder %s33, %s34
      %p48 = scmp.eq.s32.totalorder %s26, 1
      %p49 = por %p47, %p48
      %p51 = scmp.ne.s32.totalorder %s34, %s50
      %p52 = scmp.eq.s32.totalorder %s26, 0
      %p53 = por %p51, %p52
      %s55 = sadd.s32 %s54, 1
      %p58 = scmp.eq.s32.totalorder %s20, 1
      %p59 = scmp.ne.s32.totalorder %s54, %s56
      %p60 = scmp.eq.s32.totalorder %s20, 0
      %p61 = por %p59, %p60
      %p62 = scmp.ne.s32.totalorder %s54, %s56
      %p63 = scmp.eq.s32.totalorder %s25, 1
      %p64 = por %p62, %p63
      %p65 = scmp.ne.s32.totalorder %s56, %s57
      %p66 = scmp.eq.s32.totalorder %s25, 0
      %p67 = por %p65, %p66
      %p68 = scmp.ne.s32.totalorder %s56, %s57
      %p69 = scmp.eq.s32.totalorder %s26, 1
      %p70 = por %p68, %p69
      %p72 = scmp.ne.s32.totalorder %s57, %s71
      %p73 = scmp.eq.s32.totalorder %s26, 0
      %p74 = por %p72, %p73
      %s76 = sadd.s32 %s75, 1
      %p79 = scmp.eq.s32.totalorder %s20, 1
      %p80 = scmp.ne.s32.totalorder %s75, %s77
      %p81 = scmp.eq.s32.totalorder %s20, 0
      %p82 = por %p80, %p81
      %p83 = scmp.ne.s32.totalorder %s75, %s77
      %p84 = scmp.eq.s32.totalorder %s25, 1
      %p85 = por %p83, %p84
      %p86 = scmp.ne.s32.totalorder %s77, %s78
      %p87 = scmp.eq.s32.totalorder %s25, 0
      %p88 = por %p86, %p87
      %p89 = scmp.ne.s32.totalorder %s77, %s78
      %p90 = scmp.eq.s32.totalorder %s26, 1
      %p91 = por %p89, %p90
      %p93 = scmp.ne.s32.totalorder %s78, %s92
      %p94 = scmp.eq.s32.totalorder %s26, 0
      %p95 = por %p93, %p94
      %s97 = sadd.s32 %s96, 1
      %p100 = scmp.eq.s32.totalorder %s20, 1
      %p101 = scmp.ne.s32.totalorder %s96, %s98
      %p102 = scmp.eq.s32.totalorder %s20, 0
      %p103 = por %p101, %p102
      %p104 = scmp.ne.s32.totalorder %s96, %s98
      %p105 = scmp.eq.s32.totalorder %s25, 1
      %p106 = por %p104, %p105
      %p107 = scmp.ne.s32.totalorder %s98, %s99
      %p108 = scmp.eq.s32.totalorder %s25, 0
      %p109 = por %p107, %p108
      %p110 = scmp.ne.s32.totalorder %s98, %s99
      %p111 = scmp.eq.s32.totalorder %s26, 1
      %p112 = por %p110, %p111
      %p114 = scmp.ne.s32.totalorder %s99, %s113
      %p115 = scmp.eq.s32.totalorder %s26, 0
      %p116 = por %p114, %p115
      %s118 = sadd.s32 %s117, 1
      %p121 = scmp.eq.s32.totalorder %s20, 1
      %p122 = scmp.ne.s32.totalorder %s117, %s119
      %p123 = scmp.eq.s32.totalorder %s20, 0
      %p124 = por %p122, %p123
      %p125 = scmp.ne.s32.totalorder %s117, %s119
      %p126 = scmp.eq.s32.totalorder %s25, 1
      %p127 = por %p125, %p126
      %p128 = scmp.ne.s32.totalorder %s119, %s120
      %p129 = scmp.eq.s32.totalorder %s25, 0
      %p130 = por %p128, %p129
      %p131 = scmp.ne.s32.totalorder %s119, %s120
      %p132 = scmp.eq.s32.totalorder %s26, 1
      %p133 = por %p131, %p132
      %p135 = scmp.ne.s32.totalorder %s120, %s134
      %p136 = scmp.eq.s32.totalorder %s26, 0
      %p137 = por %p135, %p136
      %s139 = sadd.s32 %s138, 1
      %p142 = scmp.eq.s32.totalorder %s20, 1
      %p143 = scmp.ne.s32.totalorder %s138, %s140
      %p144 = scmp.eq.s32.totalorder %s20, 0
      %p145 = por %p143, %p144
      %p146 = scmp.ne.s32.totalorder %s138, %s140
      %p147 = scmp.eq.s32.totalorder %s25, 1
      %p148 = por %p146, %p147
      %p149 = scmp.ne.s32.totalorder %s140, %s141
      %p150 = scmp.eq.s32.totalorder %s25, 0
      %p151 = por %p149, %p150
      %p152 = scmp.ne.s32.totalorder %s140, %s141
      %p153 = scmp.eq.s32.totalorder %s26, 1
      %p154 = por %p152, %p153
      %p156 = scmp.ne.s32.totalorder %s141, %s155
      %p157 = scmp.eq.s32.totalorder %s26, 0
      %p158 = por %p156, %p157
      %s160 = sadd.s32 %s159, 1
      %p163 = scmp.eq.s32.totalorder %s20, 1
      %p164 = scmp.ne.s32.totalorder %s159, %s161
      %p165 = scmp.eq.s32.totalorder %s20, 0
      %p166 = por %p164, %p165
      %p167 = scmp.ne.s32.totalorder %s159, %s161
      %p168 = scmp.eq.s32.totalorder %s25, 1
      %p169 = por %p167, %p168
      %p170 = scmp.ne.s32.totalorder %s161, %s162
      %p171 = scmp.eq.s32.totalorder %s25, 0
      %p172 = por %p170, %p171
      %p173 = scmp.ne.s32.totalorder %s161, %s162
      %p174 = scmp.eq.s32.totalorder %s26, 1
      %p175 = por %p173, %p174
      %p177 = scmp.ne.s32.totalorder %s162, %s176
      %p178 = scmp.eq.s32.totalorder %s26, 0
      %p179 = por %p177, %p178
      %s181 = sadd.s32 %s180, 1
      %p184 = scmp.eq.s32.totalorder %s20, 1
      %p185 = scmp.ne.s32.totalorder %s180, %s182
      %p186 = scmp.eq.s32.totalorder %s20, 0
      %p187 = por %p185, %p186
      %p188 = scmp.ne.s32.totalorder %s180, %s182
      %p189 = scmp.eq.s32.totalorder %s25, 1
      %p190 = por %p188, %p189
      %p191 = scmp.ne.s32.totalorder %s182, %s183
      %p192 = scmp.eq.s32.totalorder %s25, 0
      %p193 = por %p191, %p192
      %p194 = scmp.ne.s32.totalorder %s182, %s183
      %p195 = scmp.eq.s32.totalorder %s26, 1
      %p196 = por %p194, %p195
      %p198 = scmp.ne.s32.totalorder %s183, %s197
      %p199 = scmp.eq.s32.totalorder %s26, 0
      %p200 = por %p198, %p199
      %s202 = sadd.s32 %s201, 1
      %p205 = scmp.eq.s32.totalorder %s20, 1
      %p206 = scmp.ne.s32.totalorder %s201, %s203
      %p207 = scmp.eq.s32.totalorder %s20, 0
      %p208 = por %p206, %p207
      %p209 = scmp.ne.s32.totalorder %s201, %s203
      %p210 = scmp.eq.s32.totalorder %s25, 1
      %p211 = por %p209, %p210
      %p212 = scmp.ne.s32.totalorder %s203, %s204
      %p213 = scmp.eq.s32.totalorder %s25, 0
      %p214 = por %p212, %p213
      %p215 = scmp.ne.s32.totalorder %s203, %s204
      %p216 = scmp.eq.s32.totalorder %s26, 1
      %p217 = por %p215, %p216
      %p219 = scmp.ne.s32.totalorder %s204, %s218
      %p220 = scmp.eq.s32.totalorder %s26, 0
      %p221 = por %p219, %p220
      %s223 = sadd.s32 %s222, 1
      %p226 = scmp.eq.s32.totalorder %s20, 1
      %p227 = scmp.ne.s32.totalorder %s222, %s224
      %p228 = scmp.eq.s32.totalorder %s20, 0
      %p229 = por %p227, %p228
      %p230 = scmp.ne.s32.totalorder %s222, %s224
      %p231 = scmp.eq.s32.totalorder %s25, 1
      %p232 = por %p230, %p231
      %p233 = scmp.ne.s32.totalorder %s224, %s225
      %p234 = scmp.eq.s32.totalorder %s25, 0
      %p235 = por %p233, %p234
      %p236 = scmp.ne.s32.totalorder %s224, %s225
      %p237 = scmp.eq.s32.totalorder %s26, 1
      %p238 = por %p236, %p237
      %p240 = scmp.ne.s32.totalorder %s225, %s239
      %p241 = scmp.eq.s32.totalorder %s26, 0
      %p242 = por %p240, %p241
      %s244 = sadd.s32 %s243, 1
      %p247 = scmp.eq.s32.totalorder %s20, 1
      %p248 = scmp.ne.s32.totalorder %s243, %s245
      %p249 = scmp.eq.s32.totalorder %s20, 0
      %p250 = por %p248, %p249
      %p251 = scmp.ne.s32.totalorder %s243, %s245
      %p252 = scmp.eq.s32.totalorder %s25, 1
      %p253 = por %p251, %p252
      %p254 = scmp.ne.s32.totalorder %s245, %s246
      %p255 = scmp.eq.s32.totalorder %s25, 0
      %p256 = por %p254, %p255
      %p257 = scmp.ne.s32.totalorder %s245, %s246
      %p258 = scmp.eq.s32.totalorder %s26, 1
      %p259 = por %p257, %p258
      %p261 = scmp.ne.s32.totalorder %s246, %s260
      %p262 = scmp.eq.s32.totalorder %s26, 0
      %p263 = por %p261, %p262
      %s264 = ssub.s32 %s20, %s27
      %p265 = scmp.eq.s32.totalorder %s264, 0
      %s267 = sadd.s32 %s266, 1
      %s268 = scalar_select %p265, %s266, %s267
      %p271 = pneg %p265
      %p272 = scmp.eq.s32.totalorder %s20, 1
      %p273 = por %p271, %p272
      %p274 = scmp.ne.s32.totalorder %s266, %s269
      %p275 = scmp.eq.s32.totalorder %s20, 0
      %p276 = por %p274, %p275
      %p277 = scmp.ne.s32.totalorder %s266, %s269
      %p278 = scmp.eq.s32.totalorder %s25, 1
      %p279 = por %p277, %p278
      %p280 = scmp.ne.s32.totalorder %s269, %s270
      %p281 = scmp.eq.s32.totalorder %s25, 0
      %p282 = por %p280, %p281
      %p283 = scmp.ne.s32.totalorder %s269, %s270
      %p284 = scmp.eq.s32.totalorder %s26, 1
      %p285 = por %p283, %p284
      %p287 = scmp.ne.s32.totalorder %s270, %s286
      %p288 = scmp.eq.s32.totalorder %s26, 0
      %p289 = por %p287, %p288
      %p290 = scmp.le.s32.totalorder 1, %s20
      %p291 = scmp.lt.s32.totalorder %s20, 3
      %p292 = pnand %p290, %p291
      %p293 = pneg %p292
      // Predicated region
      $region9: #{tpu_custom_call.1} parent=5 // pred_check
        _
      $region10: #{tpu_custom_call.1} parent=5 // pred_check_branch
        %295 = sbr.rel (%p292) target = $region12
      $region11: #{tpu_custom_call.1} parent=5 // pred_region
        %s296 = ssub.s32 %s20, 1
        // Predicated region
        $region13: #{tpu_custom_call.1} parent=11 // pred_check
          %p297 = pneg %p67
        $region14: #{tpu_custom_call.1} parent=11 // pred_check_branch
          %299 = sbr.rel (%p297) target = $region16
        $region15: #{tpu_custom_call.1} parent=11 // pred_region
          _
        $region16: #{tpu_custom_call.1} parent=11 // pred_fallthru
          _
        // Predicated region
        $region17: #{tpu_custom_call.1} parent=11 // pred_check
          %p300 = pneg %p88
        $region18: #{tpu_custom_call.1} parent=11 // pred_check_branch
          %302 = sbr.rel (%p300) target = $region20
        $region19: #{tpu_custom_call.1} parent=11 // pred_region
          _
        $region20: #{tpu_custom_call.1} parent=11 // pred_fallthru
          _
        // Predicated region
        $region21: #{tpu_custom_call.1} parent=11 // pred_check
          %p303 = pneg %p109
        $region22: #{tpu_custom_call.1} parent=11 // pred_check_branch
          %305 = sbr.rel (%p303) target = $region24
        $region23: #{tpu_custom_call.1} parent=11 // pred_region
          _
        $region24: #{tpu_custom_call.1} parent=11 // pred_fallthru
          _
        // Predicated region
        $region25: #{tpu_custom_call.1} parent=11 // pred_check
          %p306 = pneg %p130
        $region26: #{tpu_custom_call.1} parent=11 // pred_check_branch
          %308 = sbr.rel (%p306) target = $region28
        $region27: #{tpu_custom_call.1} parent=11 // pred_region
          _
        $region28: #{tpu_custom_call.1} parent=11 // pred_fallthru
          _
        // Predicated region
        $region29: #{tpu_custom_call.1} parent=11 // pred_check
          %p309 = pneg %p151
        $region30: #{tpu_custom_call.1} parent=11 // pred_check_branch
          %311 = sbr.rel (%p309) target = $region32
        $region31: #{tpu_custom_call.1} parent=11 // pred_region
          _
        $region32: #{tpu_custom_call.1} parent=11 // pred_fallthru
          _
        // Predicated region
        $region33: #{tpu_custom_call.1} parent=11 // pred_check
          %p312 = pneg %p172
        $region34: #{tpu_custom_call.1} parent=11 // pred_check_branch
          %314 = sbr.rel (%p312) target = $region36
        $region35: #{tpu_custom_call.1} parent=11 // pred_region
          _
        $region36: #{tpu_custom_call.1} parent=11 // pred_fallthru
          _
        // Predicated region
        $region37: #{tpu_custom_call.1} parent=11 // pred_check
          %p315 = pneg %p193
        $region38: #{tpu_custom_call.1} parent=11 // pred_check_branch
          %317 = sbr.rel (%p315) target = $region40
        $region39: #{tpu_custom_call.1} parent=11 // pred_region
          _
        $region40: #{tpu_custom_call.1} parent=11 // pred_fallthru
          _
        // Predicated region
        $region41: #{tpu_custom_call.1} parent=11 // pred_check
          %p318 = pneg %p214
        $region42: #{tpu_custom_call.1} parent=11 // pred_check_branch
          %320 = sbr.rel (%p318) target = $region44
        $region43: #{tpu_custom_call.1} parent=11 // pred_region
          _
        $region44: #{tpu_custom_call.1} parent=11 // pred_fallthru
          _
        // Predicated region
        $region45: #{tpu_custom_call.1} parent=11 // pred_check
          %p321 = pneg %p235
        $region46: #{tpu_custom_call.1} parent=11 // pred_check_branch
          %323 = sbr.rel (%p321) target = $region48
        $region47: #{tpu_custom_call.1} parent=11 // pred_region
          _
        $region48: #{tpu_custom_call.1} parent=11 // pred_fallthru
          _
        // Predicated region
        $region49: #{tpu_custom_call.1} parent=11 // pred_check
          %p324 = pneg %p256
        $region50: #{tpu_custom_call.1} parent=11 // pred_check_branch
          %326 = sbr.rel (%p324) target = $region52
        $region51: #{tpu_custom_call.1} parent=11 // pred_region
          _
        $region52: #{tpu_custom_call.1} parent=11 // pred_fallthru
          _
      $region12: #{tpu_custom_call.1} parent=5 // pred_fallthru
        _
      %p327 = scmp.lt.s32.totalorder %s20, 2
      // Predicated region
      $region53: #{tpu_custom_call.1} parent=5 // pred_check
        %p328 = pneg %p327
      $region54: #{tpu_custom_call.1} parent=5 // pred_check_branch
        %330 = sbr.rel (%p328) target = $region56
      $region55: #{tpu_custom_call.1} parent=5 // pred_region
        // Predicated region
        $region57: #{tpu_custom_call.1} parent=55 // pred_check
          %p331 = pneg %p40
        $region58: #{tpu_custom_call.1} parent=55 // pred_check_branch
          %333 = sbr.rel (%p331) target = $region60
        $region59: #{tpu_custom_call.1} parent=55 // pred_region
          %s334 = smul.u32 32, %s20
          %p335 = scmp.lt.s32.totalorder %s334, 63
          %s336 = scalar_select %p335, %s334, 63
          %s337 = smul.addr %s336, 8
          %s338 = scalar_lea.vmem %s0, %s337
          %s339 = smul.u32 32, %s20
        $region60: #{tpu_custom_call.1} parent=55 // pred_fallthru
          _
      $region56: #{tpu_custom_call.1} parent=5 // pred_fallthru
        _
      %p340 = scmp.le.s32.totalorder 1, %s20
      %p341 = scmp.lt.s32.totalorder %s20, 3
      %p342 = pnand %p340, %p341
      %p343 = pneg %p342
      // Predicated region
      $region61: #{tpu_custom_call.1} parent=5 // pred_check
        _
      $region62: #{tpu_custom_call.1} parent=5 // pred_check_branch
        %345 = sbr.rel (%p342) target = $region64
      $region63: #{tpu_custom_call.1} parent=5 // pred_region
        %s346 = ssub.s32 %s20, 1
        %s347 = smul.u32 32, %s25
        %p348 = scmp.lt.s32.totalorder %s347, 63
        %s349 = scalar_select %p348, %s347, 63
        %s350 = smul.addr %s349, 8
        %s351 = scalar_lea.vmem %s0, %s350
        %p352 = pneg %p46
        %p353 = pneg %p43
        %p354 = pneg %p67
        %p355 = pneg %p64
        %p356 = pneg %p88
        %p357 = pneg %p85
        %p358 = pneg %p109
        %p359 = pneg %p106
        %p360 = pneg %p130
        %p361 = pneg %p127
        %p362 = pneg %p151
        %p363 = pneg %p148
        %p364 = pneg %p172
        %p365 = pneg %p169
        %p366 = pneg %p193
        %p367 = pneg %p190
        %p368 = pneg %p214
        %p369 = pneg %p211
        %p370 = pneg %p235
        %p371 = pneg %p232
        %p372 = pneg %p256
        %p373 = pneg %p253
        %p374 = pneg %p282
        %p375 = pneg %p279
        %s376 = sand.u32 %s269, 1
        %s377 = scalar_lea.sflag [#allocation3], %s376
        %s378 = sand.u32 %s269, 1
        %s379 = smul.addr %s378, 256
        %s380 = scalar_lea.vmem [#allocation2], %s379
        %s381 = smul.u32 32, %s25
        %p382 = scmp.lt.s32.totalorder %s381, 63
        %s383 = scalar_select %p382, %s381, 63
        %s384 = smul.addr %s383, 8
        %s385 = scalar_lea.vmem %s0, %s384
        %s386 = smul.u32 32, %s25
        %s387 = smul.u32 32, %s25
        %v389 = vld [vmem:[%s385] sm:$0xff]
        %v390 = vld [vmem:[%s385 + $0x8] sm:$0xff]
        %v391 = vld [vmem:[%s385 + $0x10] sm:$0xff]
        %v392 = vld [vmem:[%s385 + $0x18] sm:$0xff]
        %v393 = vld [vmem:[%s385 + $0x20] sm:$0xff]
        %v394 = vld [vmem:[%s385 + $0x28] sm:$0xff]
        %v395 = vld [vmem:[%s385 + $0x30] sm:$0xff]
        %v396 = vld [vmem:[%s385 + $0x38] sm:$0xff]
        %v397 = vld [vmem:[%s385 + $0x40] sm:$0xff]
        %v398 = vld [vmem:[%s385 + $0x48] sm:$0xff]
        %v399 = vld [vmem:[%s385 + $0x50] sm:$0xff]
        %v400 = vld [vmem:[%s385 + $0x58] sm:$0xff]
        %v401 = vld [vmem:[%s385 + $0x60] sm:$0xff]
        %v402 = vld [vmem:[%s385 + $0x68] sm:$0xff]
        %v403 = vld [vmem:[%s385 + $0x70] sm:$0xff]
        %v404 = vld [vmem:[%s385 + $0x78] sm:$0xff]
        %v405 = vld [vmem:[%s385 + $0x80] sm:$0xff]
        %v406 = vld [vmem:[%s385 + $0x88] sm:$0xff]
        %v407 = vld [vmem:[%s385 + $0x90] sm:$0xff]
        %v408 = vld [vmem:[%s385 + $0x98] sm:$0xff]
        %v409 = vld [vmem:[%s385 + $0xa0] sm:$0xff]
        %v410 = vld [vmem:[%s385 + $0xa8] sm:$0xff]
        %v411 = vld [vmem:[%s385 + $0xb0] sm:$0xff]
        %v412 = vld [vmem:[%s385 + $0xb8] sm:$0xff]
        %v413 = vld [vmem:[%s385 + $0xc0] sm:$0xff]
        %v414 = vld [vmem:[%s385 + $0xc8] sm:$0xff]
        %v415 = vld [vmem:[%s385 + $0xd0] sm:$0xff]
        %v416 = vld [vmem:[%s385 + $0xd8] sm:$0xff]
        %v417 = vld [vmem:[%s385 + $0xe0] sm:$0xff]
        %v418 = vld [vmem:[%s385 + $0xe8] sm:$0xff]
        %v419 = vld [vmem:[%s385 + $0xf0] sm:$0xff]
        %v420 = vld [vmem:[%s385 + $0xf8] sm:$0xff]
        %v421 = vpack.c.bf16 %v390, %v389
        %v422 = vpack.c.bf16 %v392, %v391
        %v423 = vpack.c.bf16 %v394, %v393
        %v424 = vpack.c.bf16 %v396, %v395
        %v425 = vpack.c.bf16 %v398, %v397
        %v426 = vpack.c.bf16 %v400, %v399
        %v427 = vpack.c.bf16 %v402, %v401
        %v428 = vpack.c.bf16 %v404, %v403
        %v429 = vpack.c.bf16 %v406, %v405
        %v430 = vpack.c.bf16 %v408, %v407
        %v431 = vpack.c.bf16 %v410, %v409
        %v432 = vpack.c.bf16 %v412, %v411
        %v433 = vpack.c.bf16 %v414, %v413
        %v434 = vpack.c.bf16 %v416, %v415
        %v435 = vpack.c.bf16 %v418, %v417
        %v436 = vpack.c.bf16 %v420, %v419
        %v437 = vld [vmem:[%s1] sm:$0xff]
        %v438 = vld [vmem:[%s1 + $0x8] sm:$0x33]
        %v441 = vunpack.c.l.b16 %v437
        %v442 = vunpack.c.h.b16 %v437
        %v443 = vunpack.c.l.b16 %v438
        %v444 = vunpack.c.h.b16 %v438
        %v445 = vpack.c.b16 %v443, %v441
        %v446 = vpack.c.b16 %v444, %v442
        %vm447 = vcmask 97280
        %v449 = vsel %vm447, %v421, 0
        %v452 = vsel %vm447, %v422, 0
        %v455 = vsel %vm447, %v423, 0
        %v458 = vsel %vm447, %v424, 0
        %v461 = vsel %vm447, %v425, 0
        %v464 = vsel %vm447, %v426, 0
        %v467 = vsel %vm447, %v427, 0
        %v470 = vsel %vm447, %v428, 0
        %v473 = vsel %vm447, %v429, 0
        %v476 = vsel %vm447, %v430, 0
        %v479 = vsel %vm447, %v431, 0
        %v482 = vsel %vm447, %v432, 0
        %v485 = vsel %vm447, %v433, 0
        %v488 = vsel %vm447, %v434, 0
        %v491 = vsel %vm447, %v435, 0
        %v494 = vsel %vm447, %v436, 0
        %vm496 = vcmask 1045504
        %v498 = vsel %vm496, %v445, 0
        %v501 = vsel %vm496, %v446, 0
        %503 = vmatprep.subr.bf16.mxu0 %v501
        %504 = vmatpush1.bf16.msra.mxu0 %v498
        %505 = vmatprep.subr.bf16.mxu0 0
        %506 = vmatpush1.bf16.msra.mxu0 0
        %507 = vmatprep.subr.bf16.mxu0 0
        %508 = vmatpush1.bf16.msra.mxu0 0
        %509 = vmatprep.subr.bf16.mxu0 0
        %510 = vmatpush1.bf16.msra.mxu0 0
        %511 = vmatprep.subr.bf16.mxu0 0
        %512 = vmatpush1.bf16.msra.mxu0 0
        %513 = vmatprep.subr.bf16.mxu0 0
        %514 = vmatpush1.bf16.msra.mxu0 0
        %515 = vmatprep.subr.bf16.mxu0 0
        %516 = vmatpush1.bf16.msra.mxu0 0
        %517 = vmatprep.subr.bf16.mxu0 0
        %518 = vmatpush1.bf16.msra.mxu0 0
        %519 = vmatprep.subr.bf16.mxu0 0
        %520 = vmatpush1.bf16.msra.mxu0 0
        %521 = vmatprep.subr.bf16.mxu0 0
        %522 = vmatpush1.bf16.msra.mxu0 0
        %523 = vmatprep.subr.bf16.mxu0 0
        %524 = vmatpush1.bf16.msra.mxu0 0
        %525 = vmatprep.subr.bf16.mxu0 0
        %526 = vmatpush1.bf16.msra.mxu0 0
        %527 = vmatprep.subr.bf16.mxu0 0
        %528 = vmatpush1.bf16.msra.mxu0 0
        %529 = vmatprep.subr.bf16.mxu0 0
        %530 = vmatpush1.bf16.msra.mxu0 0
        %531 = vmatprep.subr.bf16.mxu0 0
        %532 = vmatpush1.bf16.msra.mxu0 0
        %533 = vmatprep.subr.bf16.mxu0 0
        %534 = vmatpush1.bf16.msra.mxu0 0
        %535 = vmatprep.mubr.bf16.mxu0 0
        %536 = vmatmul.mubr.bf16.gmra.mrb[0].mxu0 %v449
        %v537 = vpop.f32.mrb[0].mxu0
        %v538 = vadd.f32 0.0, %v537
        %v539 = vpop.f32.mrb[0].mxu0
        %v540 = vadd.f32 0.0, %v539
        %v541 = vpop.f32.mrb[0].mxu0
        %v542 = vadd.f32 0.0, %v541
        %v543 = vpop.f32.mrb[0].mxu0
        %v544 = vadd.f32 0.0, %v543
        %545 = vmatprep.mubr.bf16.mxu0 0
        %546 = vmatmul.mubr.bf16.gmra.mrb[0].mxu0 %v452
        %v547 = vpop.f32.mrb[0].mxu0
        %v548 = vadd.f32 0.0, %v547
        %v549 = vpop.f32.mrb[0].mxu0
        %v550 = vadd.f32 0.0, %v549
        %v551 = vpop.f32.mrb[0].mxu0
        %v552 = vadd.f32 0.0, %v551
        %v553 = vpop.f32.mrb[0].mxu0
        %v554 = vadd.f32 0.0, %v553
        %555 = vmatprep.mubr.bf16.mxu0 0
        %556 = vmatmul.mubr.bf16.gmra.mrb[0].mxu0 %v455
        %v557 = vpop.f32.mrb[0].mxu0
        %v558 = vadd.f32 0.0, %v557
        %v559 = vpop.f32.mrb[0].mxu0
        %v560 = vadd.f32 0.0, %v559
        %v561 = vpop.f32.mrb[0].mxu0
        %v562 = vadd.f32 0.0, %v561
        %v563 = vpop.f32.mrb[0].mxu0
        %v564 = vadd.f32 0.0, %v563
        %565 = vmatprep.mubr.bf16.mxu0 0
        %566 = vmatmul.mubr.bf16.gmra.mrb[0].mxu0 %v458
        %v567 = vpop.f32.mrb[0].mxu0
        %v568 = vadd.f32 0.0, %v567
        %v569 = vpop.f32.mrb[0].mxu0
        %v570 = vadd.f32 0.0, %v569
        %v571 = vpop.f32.mrb[0].mxu0
        %v572 = vadd.f32 0.0, %v571
        %v573 = vpop.f32.mrb[0].mxu0
        %v574 = vadd.f32 0.0, %v573
        %575 = vmatprep.mubr.bf16.mxu0 0
        %576 = vmatmul.mubr.bf16.gmra.mrb[0].mxu0 %v461
        %v577 = vpop.f32.mrb[0].mxu0
        %v578 = vadd.f32 0.0, %v577
        %v579 = vpop.f32.mrb[0].mxu0
        %v580 = vadd.f32 0.0, %v579
        %v581 = vpop.f32.mrb[0].mxu0
        %v582 = vadd.f32 0.0, %v581
        %v583 = vpop.f32.mrb[0].mxu0
        %v584 = vadd.f32 0.0, %v583
        %585 = vmatprep.mubr.bf16.mxu0 0
        %586 = vmatmul.mubr.bf16.gmra.mrb[0].mxu0 %v464
        %v587 = vpop.f32.mrb[0].mxu0
        %v588 = vadd.f32 0.0, %v587
        %v589 = vpop.f32.mrb[0].mxu0
        %v590 = vadd.f32 0.0, %v589
        %v591 = vpop.f32.mrb[0].mxu0
        %v592 = vadd.f32 0.0, %v591
        %v593 = vpop.f32.mrb[0].mxu0
        %v594 = vadd.f32 0.0, %v593
        %595 = vmatprep.mubr.bf16.mxu0 0
        %596 = vmatmul.mubr.bf16.gmra.mrb[0].mxu0 %v467
        %v597 = vpop.f32.mrb[0].mxu0
        %v598 = vadd.f32 0.0, %v597
        %v599 = vpop.f32.mrb[0].mxu0
        %v600 = vadd.f32 0.0, %v599
        %v601 = vpop.f32.mrb[0].mxu0
        %v602 = vadd.f32 0.0, %v601
        %v603 = vpop.f32.mrb[0].mxu0
        %v604 = vadd.f32 0.0, %v603
        %605 = vmatprep.mubr.bf16.mxu0 0
        %606 = vmatmul.mubr.bf16.gmra.mrb[0].mxu0 %v470
        %v607 = vpop.f32.mrb[0].mxu0
        %v608 = vadd.f32 0.0, %v607
        %v609 = vpop.f32.mrb[0].mxu0
        %v610 = vadd.f32 0.0, %v609
        %v611 = vpop.f32.mrb[0].mxu0
        %v612 = vadd.f32 0.0, %v611
        %v613 = vpop.f32.mrb[0].mxu0
        %v614 = vadd.f32 0.0, %v613
        %615 = vmatprep.mubr.bf16.mxu0 0
        %616 = vmatmul.mubr.bf16.gmra.mrb[0].mxu0 %v473
        %v617 = vpop.f32.mrb[0].mxu0
        %v618 = vadd.f32 0.0, %v617
        %v619 = vpop.f32.mrb[0].mxu0
        %v620 = vadd.f32 0.0, %v619
        %v621 = vpop.f32.mrb[0].mxu0
        %v622 = vadd.f32 0.0, %v621
        %v623 = vpop.f32.mrb[0].mxu0
        %v624 = vadd.f32 0.0, %v623
        %625 = vmatprep.mubr.bf16.mxu0 0
        %626 = vmatmul.mubr.bf16.gmra.mrb[0].mxu0 %v476
        %v627 = vpop.f32.mrb[0].mxu0
        %v628 = vadd.f32 0.0, %v627
        %v629 = vpop.f32.mrb[0].mxu0
        %v630 = vadd.f32 0.0, %v629
        %v631 = vpop.f32.mrb[0].mxu0
        %v632 = vadd.f32 0.0, %v631
        %v633 = vpop.f32.mrb[0].mxu0
        %v634 = vadd.f32 0.0, %v633
        %635 = vmatprep.mubr.bf16.mxu0 0
        %636 = vmatmul.mubr.bf16.gmra.mrb[0].mxu0 %v479
        %v637 = vpop.f32.mrb[0].mxu0
        %v638 = vadd.f32 0.0, %v637
        %v639 = vpop.f32.mrb[0].mxu0
        %v640 = vadd.f32 0.0, %v639
        %v641 = vpop.f32.mrb[0].mxu0
        %v642 = vadd.f32 0.0, %v641
        %v643 = vpop.f32.mrb[0].mxu0
        %v644 = vadd.f32 0.0, %v643
        %645 = vmatprep.mubr.bf16.mxu0 0
        %646 = vmatmul.mubr.bf16.gmra.mrb[0].mxu0 %v482
        %v647 = vpop.f32.mrb[0].mxu0
        %v648 = vadd.f32 0.0, %v647
        %v649 = vpop.f32.mrb[0].mxu0
        %v650 = vadd.f32 0.0, %v649
        %v651 = vpop.f32.mrb[0].mxu0
        %v652 = vadd.f32 0.0, %v651
        %v653 = vpop.f32.mrb[0].mxu0
        %v654 = vadd.f32 0.0, %v653
        %655 = vmatprep.mubr.bf16.mxu0 0
        %656 = vmatmul.mubr.bf16.gmra.mrb[0].mxu0 %v485
        %v657 = vpop.f32.mrb[0].mxu0
        %v658 = vadd.f32 0.0, %v657
        %v659 = vpop.f32.mrb[0].mxu0
        %v660 = vadd.f32 0.0, %v659
        %v661 = vpop.f32.mrb[0].mxu0
        %v662 = vadd.f32 0.0, %v661
        %v663 = vpop.f32.mrb[0].mxu0
        %v664 = vadd.f32 0.0, %v663
        %665 = vmatprep.mubr.bf16.mxu0 0
        %666 = vmatmul.mubr.bf16.gmra.mrb[0].mxu0 %v488
        %v667 = vpop.f32.mrb[0].mxu0
        %v668 = vadd.f32 0.0, %v667
        %v669 = vpop.f32.mrb[0].mxu0
        %v670 = vadd.f32 0.0, %v669
        %v671 = vpop.f32.mrb[0].mxu0
        %v672 = vadd.f32 0.0, %v671
        %v673 = vpop.f32.mrb[0].mxu0
        %v674 = vadd.f32 0.0, %v673
        %675 = vmatprep.mubr.bf16.mxu0 0
        %676 = vmatmul.mubr.bf16.gmra.mrb[0].mxu0 %v491
        %v677 = vpop.f32.mrb[0].mxu0
        %v678 = vadd.f32 0.0, %v677
        %v679 = vpop.f32.mrb[0].mxu0
        %v680 = vadd.f32 0.0, %v679
        %v681 = vpop.f32.mrb[0].mxu0
        %v682 = vadd.f32 0.0, %v681
        %v683 = vpop.f32.mrb[0].mxu0
        %v684 = vadd.f32 0.0, %v683
        %685 = vmatprep.mubr.bf16.mxu0 0
        %686 = vmatmul.mubr.bf16.gmra.mrb[0].mxu0 %v494
        %v687 = vpop.f32.mrb[0].mxu0
        %v688 = vadd.f32 0.0, %v687
        %v689 = vpop.f32.mrb[0].mxu0
        %v690 = vadd.f32 0.0, %v689
        %v691 = vpop.f32.mrb[0].mxu0
        %v692 = vadd.f32 0.0, %v691
        %v693 = vpop.f32.mrb[0].mxu0
        %v694 = vadd.f32 0.0, %v693
        %695 = vdwg.mxu0
        %v696 = vld [vmem:[%s2] sm:$0x1]
        %v698 = vlaneseq
        %v699 = vshrl.u32 %v698, 7
        %v700 = vsub.s32 0, %v699
        %v701 = vrot.slane %v696, %v700
        %v703 = vadd.f32 %v538, %v701
        %v704 = vadd.f32 %v542, %v701
        %v705 = vadd.f32 %v548, %v701
        %v706 = vadd.f32 %v552, %v701
        %v707 = vadd.f32 %v558, %v701
        %v708 = vadd.f32 %v562, %v701
        %v709 = vadd.f32 %v568, %v701
        %v710 = vadd.f32 %v572, %v701
        %v711 = vadd.f32 %v578, %v701
        %v712 = vadd.f32 %v582, %v701
        %v713 = vadd.f32 %v588, %v701
        %v714 = vadd.f32 %v592, %v701
        %v715 = vadd.f32 %v598, %v701
        %v716 = vadd.f32 %v602, %v701
        %v717 = vadd.f32 %v608, %v701
        %v718 = vadd.f32 %v612, %v701
        %v719 = vadd.f32 %v618, %v701
        %v720 = vadd.f32 %v622, %v701
        %v721 = vadd.f32 %v628, %v701
        %v722 = vadd.f32 %v632, %v701
        %v723 = vadd.f32 %v638, %v701
        %v724 = vadd.f32 %v642, %v701
        %v725 = vadd.f32 %v648, %v701
        %v726 = vadd.f32 %v652, %v701
        %v727 = vadd.f32 %v658, %v701
        %v728 = vadd.f32 %v662, %v701
        %v729 = vadd.f32 %v668, %v701
        %v730 = vadd.f32 %v672, %v701
        %v731 = vadd.f32 %v678, %v701
        %v732 = vadd.f32 %v682, %v701
        %v733 = vadd.f32 %v688, %v701
        %v734 = vadd.f32 %v692, %v701
        %v735 = vmax.f32 %v703, 0.0
        %v736 = vmax.f32 %v704, 0.0
        %v737 = vmax.f32 %v705, 0.0
        %v738 = vmax.f32 %v706, 0.0
        %v739 = vmax.f32 %v707, 0.0
        %v740 = vmax.f32 %v708, 0.0
        %v741 = vmax.f32 %v709, 0.0
        %v742 = vmax.f32 %v710, 0.0
        %v743 = vmax.f32 %v711, 0.0
        %v744 = vmax.f32 %v712, 0.0
        %v745 = vmax.f32 %v713, 0.0
        %v746 = vmax.f32 %v714, 0.0
        %v747 = vmax.f32 %v715, 0.0
        %v748 = vmax.f32 %v716, 0.0
        %v749 = vmax.f32 %v717, 0.0
        %v750 = vmax.f32 %v718, 0.0
        %v751 = vmax.f32 %v719, 0.0
        %v752 = vmax.f32 %v720, 0.0
        %v753 = vmax.f32 %v721, 0.0
        %v754 = vmax.f32 %v722, 0.0
        %v755 = vmax.f32 %v723, 0.0
        %v756 = vmax.f32 %v724, 0.0
        %v757 = vmax.f32 %v725, 0.0
        %v758 = vmax.f32 %v726, 0.0
        %v759 = vmax.f32 %v727, 0.0
        %v760 = vmax.f32 %v728, 0.0
        %v761 = vmax.f32 %v729, 0.0
        %v762 = vmax.f32 %v730, 0.0
        %v763 = vmax.f32 %v731, 0.0
        %v764 = vmax.f32 %v732, 0.0
        %v765 = vmax.f32 %v733, 0.0
        %v766 = vmax.f32 %v734, 0.0
        %v767 = vpack.c.bf16 %v736, %v735
        %v768 = vpack.c.bf16 %v738, %v737
        %v769 = vpack.c.bf16 %v740, %v739
        %v770 = vpack.c.bf16 %v742, %v741
        %v771 = vpack.c.bf16 %v744, %v743
        %v772 = vpack.c.bf16 %v746, %v745
        %v773 = vpack.c.bf16 %v748, %v747
        %v774 = vpack.c.bf16 %v750, %v749
        %v775 = vpack.c.bf16 %v752, %v751
        %v776 = vpack.c.bf16 %v754, %v753
        %v777 = vpack.c.bf16 %v756, %v755
        %v778 = vpack.c.bf16 %v758, %v757
        %v779 = vpack.c.bf16 %v760, %v759
        %v780 = vpack.c.bf16 %v762, %v761
        %v781 = vpack.c.bf16 %v764, %v763
        %v782 = vpack.c.bf16 %v766, %v765
        %v783 = vld [vmem:[%s3] sm:$0xf]
        %v784 = vld [vmem:[%s3 + $0x4] sm:$0xf]
        %v785 = vld [vmem:[%s3 + $0x8] sm:$0xf]
        %v786 = vld [vmem:[%s3 + $0xc] sm:$0xf]
        %v787 = vld [vmem:[%s3 + $0x10] sm:$0xf]
        %v788 = vld [vmem:[%s3 + $0x14] sm:$0xf]
        %v789 = vld [vmem:[%s3 + $0x18] sm:$0xf]
        %v790 = vld [vmem:[%s3 + $0x1c] sm:$0xf]
        %v791 = vld [vmem:[%s3 + $0x20] sm:$0xf]
        %v792 = vld [vmem:[%s3 + $0x24] sm:$0xf]
        %v793 = vld [vmem:[%s3 + $0x28] sm:$0xf]
        %v794 = vld [vmem:[%s3 + $0x2c] sm:$0xf]
        %v795 = vld [vmem:[%s3 + $0x30] sm:$0xf]
        %v796 = vld [vmem:[%s3 + $0x34] sm:$0xf]
        %v797 = vld [vmem:[%s3 + $0x38] sm:$0xf]
        %v798 = vld [vmem:[%s3 + $0x3c] sm:$0xf]
        %v799 = vld [vmem:[%s4] sm:$0x1]
        %v801 = vlaneseq
        %v802 = vshrl.u32 %v801, 7
        %v803 = vsub.s32 0, %v802
        %v804 = vrot.slane %v799, %v803
        %v822 = vunpack.c.l.b16 %v783
        %v823 = vunpack.c.l.b16 %v784
        %v824 = vunpack.c.l.b16 %v785
        %v825 = vunpack.c.l.b16 %v786
        %v826 = vunpack.c.l.b16 %v787
        %v827 = vunpack.c.l.b16 %v788
        %v828 = vunpack.c.l.b16 %v789
        %v829 = vunpack.c.l.b16 %v790
        %v830 = vunpack.c.l.b16 %v791
        %v831 = vunpack.c.l.b16 %v792
        %v832 = vunpack.c.l.b16 %v793
        %v833 = vunpack.c.l.b16 %v794
        %v834 = vunpack.c.l.b16 %v795
        %v835 = vunpack.c.l.b16 %v796
        %v836 = vunpack.c.l.b16 %v797
        %v837 = vunpack.c.l.b16 %v798
        %v838 = vpack.c.b16 %v823, %v822
        %v839 = vpack.c.b16 %v825, %v824
        %v840 = vpack.c.b16 %v827, %v826
        %v841 = vpack.c.b16 %v829, %v828
        %v842 = vpack.c.b16 %v831, %v830
        %v843 = vpack.c.b16 %v833, %v832
        %v844 = vpack.c.b16 %v835, %v834
        %v845 = vpack.c.b16 %v837, %v836
        %854 = vmatprep.subr.bf16.mxu0 0
        %855 = vmatpush1.bf16.msra.mxu0 %v838
        %856 = vmatprep.subr.bf16.mxu0 0
        %857 = vmatpush1.bf16.msra.mxu0 %v839
        %858 = vmatprep.subr.bf16.mxu0 0
        %859 = vmatpush1.bf16.msra.mxu0 %v840
        %860 = vmatprep.subr.bf16.mxu0 0
        %861 = vmatpush1.bf16.msra.mxu0 %v841
        %862 = vmatprep.subr.bf16.mxu0 0
        %863 = vmatpush1.bf16.msra.mxu0 %v842
        %864 = vmatprep.subr.bf16.mxu0 0
        %865 = vmatpush1.bf16.msra.mxu0 %v843
        %866 = vmatprep.subr.bf16.mxu0 0
        %867 = vmatpush1.bf16.msra.mxu0 %v844
        %868 = vmatprep.subr.bf16.mxu0 0
        %869 = vmatpush1.bf16.msra.mxu0 %v845
        %870 = vmatprep.subr.bf16.mxu0 0
        %871 = vmatpush1.bf16.msra.mxu0 0
        %872 = vmatprep.subr.bf16.mxu0 0
        %873 = vmatpush1.bf16.msra.mxu0 0
        %874 = vmatprep.subr.bf16.mxu0 0
        %875 = vmatpush1.bf16.msra.mxu0 0
        %876 = vmatprep.subr.bf16.mxu0 0
        %877 = vmatpush1.bf16.msra.mxu0 0
        %878 = vmatprep.subr.bf16.mxu0 0
        %879 = vmatpush1.bf16.msra.mxu0 0
        %880 = vmatprep.subr.bf16.mxu0 0
        %881 = vmatpush1.bf16.msra.mxu0 0
        %882 = vmatprep.subr.bf16.mxu0 0
        %883 = vmatpush1.bf16.msra.mxu0 0
        %884 = vmatprep.subr.bf16.mxu0 0
        %885 = vmatpush1.bf16.msra.mxu0 0
        %886 = vmatprep.mubr.bf16.mxu0 0
        %887 = vmatmul.mubr.bf16.gmra.mrb[0].mxu0 %v767
        %v888 = vpop.f32.mrb[0].mxu0
        %v889 = vadd.f32 %v804, %v888
        %v890 = vpop.f32.mrb[0].mxu0
        %v891 = vpop.f32.mrb[0].mxu0
        %v892 = vadd.f32 %v804, %v891
        %v893 = vpop.f32.mrb[0].mxu0
        %894 = vmatprep.mubr.bf16.mxu0 0
        %895 = vmatmul.mubr.bf16.gmra.mrb[0].mxu0 %v768
        %v896 = vpop.f32.mrb[0].mxu0
        %v897 = vadd.f32 %v804, %v896
        %v898 = vpop.f32.mrb[0].mxu0
        %v899 = vpop.f32.mrb[0].mxu0
        %v900 = vadd.f32 %v804, %v899
        %v901 = vpop.f32.mrb[0].mxu0
        %902 = vmatprep.mubr.bf16.mxu0 0
        %903 = vmatmul.mubr.bf16.gmra.mrb[0].mxu0 %v769
        %v904 = vpop.f32.mrb[0].mxu0
        %v905 = vadd.f32 %v804, %v904
        %v906 = vpop.f32.mrb[0].mxu0
        %v907 = vpop.f32.mrb[0].mxu0
        %v908 = vadd.f32 %v804, %v907
        %v909 = vpop.f32.mrb[0].mxu0
        %910 = vmatprep.mubr.bf16.mxu0 0
        %911 = vmatmul.mubr.bf16.gmra.mrb[0].mxu0 %v770
        %v912 = vpop.f32.mrb[0].mxu0
        %v913 = vadd.f32 %v804, %v912
        %v914 = vpop.f32.mrb[0].mxu0
        %v915 = vpop.f32.mrb[0].mxu0
        %v916 = vadd.f32 %v804, %v915
        %v917 = vpop.f32.mrb[0].mxu0
        %918 = vmatprep.mubr.bf16.mxu0 0
        %919 = vmatmul.mubr.bf16.gmra.mrb[0].mxu0 %v771
        %v920 = vpop.f32.mrb[0].mxu0
        %v921 = vadd.f32 %v804, %v920
        %v922 = vpop.f32.mrb[0].mxu0
        %v923 = vpop.f32.mrb[0].mxu0
        %v924 = vadd.f32 %v804, %v923
        %v925 = vpop.f32.mrb[0].mxu0
        %926 = vmatprep.mubr.bf16.mxu0 0
        %927 = vmatmul.mubr.bf16.gmra.mrb[0].mxu0 %v772
        %v928 = vpop.f32.mrb[0].mxu0
        %v929 = vadd.f32 %v804, %v928
        %v930 = vpop.f32.mrb[0].mxu0
        %v931 = vpop.f32.mrb[0].mxu0
        %v932 = vadd.f32 %v804, %v931
        %v933 = vpop.f32.mrb[0].mxu0
        %934 = vmatprep.mubr.bf16.mxu0 0
        %935 = vmatmul.mubr.bf16.gmra.mrb[0].mxu0 %v773
        %v936 = vpop.f32.mrb[0].mxu0
        %v937 = vadd.f32 %v804, %v936
        %v938 = vpop.f32.mrb[0].mxu0
        %v939 = vpop.f32.mrb[0].mxu0
        %v940 = vadd.f32 %v804, %v939
        %v941 = vpop.f32.mrb[0].mxu0
        %942 = vmatprep.mubr.bf16.mxu0 0
        %943 = vmatmul.mubr.bf16.gmra.mrb[0].mxu0 %v774
        %v944 = vpop.f32.mrb[0].mxu0
        %v945 = vadd.f32 %v804, %v944
        %v946 = vpop.f32.mrb[0].mxu0
        %v947 = vpop.f32.mrb[0].mxu0
        %v948 = vadd.f32 %v804, %v947
        %v949 = vpop.f32.mrb[0].mxu0
        %950 = vmatprep.mubr.bf16.mxu0 0
        %951 = vmatmul.mubr.bf16.gmra.mrb[0].mxu0 %v775
        %v952 = vpop.f32.mrb[0].mxu0
        %v953 = vadd.f32 %v804, %v952
        %v954 = vpop.f32.mrb[0].mxu0
        %v955 = vpop.f32.mrb[0].mxu0
        %v956 = vadd.f32 %v804, %v955
        %v957 = vpop.f32.mrb[0].mxu0
        %958 = vmatprep.mubr.bf16.mxu0 0
        %959 = vmatmul.mubr.bf16.gmra.mrb[0].mxu0 %v776
        %v960 = vpop.f32.mrb[0].mxu0
        %v961 = vadd.f32 %v804, %v960
        %v962 = vpop.f32.mrb[0].mxu0
        %v963 = vpop.f32.mrb[0].mxu0
        %v964 = vadd.f32 %v804, %v963
        %v965 = vpop.f32.mrb[0].mxu0
        %966 = vmatprep.mubr.bf16.mxu0 0
        %967 = vmatmul.mubr.bf16.gmra.mrb[0].mxu0 %v777
        %v968 = vpop.f32.mrb[0].mxu0
        %v969 = vadd.f32 %v804, %v968
        %v970 = vpop.f32.mrb[0].mxu0
        %v971 = vpop.f32.mrb[0].mxu0
        %v972 = vadd.f32 %v804, %v971
        %v973 = vpop.f32.mrb[0].mxu0
        %974 = vmatprep.mubr.bf16.mxu0 0
        %975 = vmatmul.mubr.bf16.gmra.mrb[0].mxu0 %v778
        %v976 = vpop.f32.mrb[0].mxu0
        %v977 = vadd.f32 %v804, %v976
        %v978 = vpop.f32.mrb[0].mxu0
        %v979 = vpop.f32.mrb[0].mxu0
        %v980 = vadd.f32 %v804, %v979
        %v981 = vpop.f32.mrb[0].mxu0
        %982 = vmatprep.mubr.bf16.mxu0 0
        %983 = vmatmul.mubr.bf16.gmra.mrb[0].mxu0 %v779
        %v984 = vpop.f32.mrb[0].mxu0
        %v985 = vadd.f32 %v804, %v984
        %v986 = vpop.f32.mrb[0].mxu0
        %v987 = vpop.f32.mrb[0].mxu0
        %v988 = vadd.f32 %v804, %v987
        %v989 = vpop.f32.mrb[0].mxu0
        %990 = vmatprep.mubr.bf16.mxu0 0
        %991 = vmatmul.mubr.bf16.gmra.mrb[0].mxu0 %v780
        %v992 = vpop.f32.mrb[0].mxu0
        %v993 = vadd.f32 %v804, %v992
        %v994 = vpop.f32.mrb[0].mxu0
        %v995 = vpop.f32.mrb[0].mxu0
        %v996 = vadd.f32 %v804, %v995
        %v997 = vpop.f32.mrb[0].mxu0
        %998 = vmatprep.mubr.bf16.mxu0 0
        %999 = vmatmul.mubr.bf16.gmra.mrb[0].mxu0 %v781
        %v1000 = vpop.f32.mrb[0].mxu0
        %v1001 = vadd.f32 %v804, %v1000
        %v1002 = vpop.f32.mrb[0].mxu0
        %v1003 = vpop.f32.mrb[0].mxu0
        %v1004 = vadd.f32 %v804, %v1003
        %v1005 = vpop.f32.mrb[0].mxu0
        %1006 = vmatprep.mubr.bf16.mxu0 0
        %1007 = vmatmul.mubr.bf16.gmra.mrb[0].mxu0 %v782
        %v1008 = vpop.f32.mrb[0].mxu0
        %v1009 = vadd.f32 %v804, %v1008
        %v1010 = vpop.f32.mrb[0].mxu0
        %v1011 = vpop.f32.mrb[0].mxu0
        %v1012 = vadd.f32 %v804, %v1011
        %v1013 = vpop.f32.mrb[0].mxu0
        %1014 = vdwg.mxu0
        %v1015 = vmax.f32 %v889, 0.0
        %v1016 = vmax.f32 %v892, 0.0
        %v1017 = vmax.f32 %v897, 0.0
        %v1018 = vmax.f32 %v900, 0.0
        %v1019 = vmax.f32 %v905, 0.0
        %v1020 = vmax.f32 %v908, 0.0
        %v1021 = vmax.f32 %v913, 0.0
        %v1022 = vmax.f32 %v916, 0.0
        %v1023 = vmax.f32 %v921, 0.0
        %v1024 = vmax.f32 %v924, 0.0
        %v1025 = vmax.f32 %v929, 0.0
        %v1026 = vmax.f32 %v932, 0.0
        %v1027 = vmax.f32 %v937, 0.0
        %v1028 = vmax.f32 %v940, 0.0
        %v1029 = vmax.f32 %v945, 0.0
        %v1030 = vmax.f32 %v948, 0.0
        %v1031 = vmax.f32 %v953, 0.0
        %v1032 = vmax.f32 %v956, 0.0
        %v1033 = vmax.f32 %v961, 0.0
        %v1034 = vmax.f32 %v964, 0.0
        %v1035 = vmax.f32 %v969, 0.0
        %v1036 = vmax.f32 %v972, 0.0
        %v1037 = vmax.f32 %v977, 0.0
        %v1038 = vmax.f32 %v980, 0.0
        %v1039 = vmax.f32 %v985, 0.0
        %v1040 = vmax.f32 %v988, 0.0
        %v1041 = vmax.f32 %v993, 0.0
        %v1042 = vmax.f32 %v996, 0.0
        %v1043 = vmax.f32 %v1001, 0.0
        %v1044 = vmax.f32 %v1004, 0.0
        %v1045 = vmax.f32 %v1009, 0.0
        %v1046 = vmax.f32 %v1012, 0.0
        %v1047 = vpack.c.bf16 %v1016, %v1015
        %v1048 = vpack.c.bf16 %v1018, %v1017
        %v1049 = vpack.c.bf16 %v1020, %v1019
        %v1050 = vpack.c.bf16 %v1022, %v1021
        %v1051 = vpack.c.bf16 %v1024, %v1023
        %v1052 = vpack.c.bf16 %v1026, %v1025
        %v1053 = vpack.c.bf16 %v1028, %v1027
        %v1054 = vpack.c.bf16 %v1030, %v1029
        %v1055 = vpack.c.bf16 %v1032, %v1031
        %v1056 = vpack.c.bf16 %v1034, %v1033
        %v1057 = vpack.c.bf16 %v1036, %v1035
        %v1058 = vpack.c.bf16 %v1038, %v1037
        %v1059 = vpack.c.bf16 %v1040, %v1039
        %v1060 = vpack.c.bf16 %v1042, %v1041
        %v1061 = vpack.c.bf16 %v1044, %v1043
        %v1062 = vpack.c.bf16 %v1046, %v1045
        %v1063 = vld [vmem:[%s5] sm:$0xf]
        %v1064 = vld [vmem:[%s5 + $0x4] sm:$0xf]
        %v1065 = vld [vmem:[%s5 + $0x8] sm:$0xf]
        %v1066 = vld [vmem:[%s5 + $0xc] sm:$0xf]
        %v1067 = vld [vmem:[%s5 + $0x10] sm:$0xf]
        %v1068 = vld [vmem:[%s5 + $0x14] sm:$0xf]
        %v1069 = vld [vmem:[%s5 + $0x18] sm:$0xf]
        %v1070 = vld [vmem:[%s5 + $0x1c] sm:$0xf]
        %v1071 = vld [vmem:[%s5 + $0x20] sm:$0xf]
        %v1072 = vld [vmem:[%s5 + $0x24] sm:$0xf]
        %v1073 = vld [vmem:[%s5 + $0x28] sm:$0xf]
        %v1074 = vld [vmem:[%s5 + $0x2c] sm:$0xf]
        %v1075 = vld [vmem:[%s5 + $0x30] sm:$0xf]
        %v1076 = vld [vmem:[%s5 + $0x34] sm:$0xf]
        %v1077 = vld [vmem:[%s5 + $0x38] sm:$0xf]
        %v1078 = vld [vmem:[%s5 + $0x3c] sm:$0xf]
        %v1095 = vunpack.c.l.b16 %v1063
        %v1096 = vunpack.c.l.b16 %v1064
        %v1097 = vunpack.c.l.b16 %v1065
        %v1098 = vunpack.c.l.b16 %v1066
        %v1099 = vunpack.c.l.b16 %v1067
        %v1100 = vunpack.c.l.b16 %v1068
        %v1101 = vunpack.c.l.b16 %v1069
        %v1102 = vunpack.c.l.b16 %v1070
        %v1103 = vunpack.c.l.b16 %v1071
        %v1104 = vunpack.c.l.b16 %v1072
        %v1105 = vunpack.c.l.b16 %v1073
        %v1106 = vunpack.c.l.b16 %v1074
        %v1107 = vunpack.c.l.b16 %v1075
        %v1108 = vunpack.c.l.b16 %v1076
        %v1109 = vunpack.c.l.b16 %v1077
        %v1110 = vunpack.c.l.b16 %v1078
        %v1111 = vpack.c.b16 %v1096, %v1095
        %v1112 = vpack.c.b16 %v1098, %v1097
        %v1113 = vpack.c.b16 %v1100, %v1099
        %v1114 = vpack.c.b16 %v1102, %v1101
        %v1115 = vpack.c.b16 %v1104, %v1103
        %v1116 = vpack.c.b16 %v1106, %v1105
        %v1117 = vpack.c.b16 %v1108, %v1107
        %v1118 = vpack.c.b16 %v1110, %v1109
        %1127 = vmatprep.subr.bf16.mxu0 0
        %1128 = vmatpush1.bf16.msra.mxu0 %v1111
        %1129 = vmatprep.subr.bf16.mxu0 0
        %1130 = vmatpush1.bf16.msra.mxu0 %v1112
        %1131 = vmatprep.subr.bf16.mxu0 0
        %1132 = vmatpush1.bf16.msra.mxu0 %v1113
        %1133 = vmatprep.subr.bf16.mxu0 0
        %1134 = vmatpush1.bf16.msra.mxu0 %v1114
        %1135 = vmatprep.subr.bf16.mxu0 0
        %1136 = vmatpush1.bf16.msra.mxu0 %v1115
        %1137 = vmatprep.subr.bf16.mxu0 0
        %1138 = vmatpush1.bf16.msra.mxu0 %v1116
        %1139 = vmatprep.subr.bf16.mxu0 0
        %1140 = vmatpush1.bf16.msra.mxu0 %v1117
        %1141 = vmatprep.subr.bf16.mxu0 0
        %1142 = vmatpush1.bf16.msra.mxu0 %v1118
        %1143 = vmatprep.subr.bf16.mxu0 0
        %1144 = vmatpush1.bf16.msra.mxu0 0
        %1145 = vmatprep.subr.bf16.mxu0 0
        %1146 = vmatpush1.bf16.msra.mxu0 0
        %1147 = vmatprep.subr.bf16.mxu0 0
        %1148 = vmatpush1.bf16.msra.mxu0 0
        %1149 = vmatprep.subr.bf16.mxu0 0
        %1150 = vmatpush1.bf16.msra.mxu0 0
        %1151 = vmatprep.subr.bf16.mxu0 0
        %1152 = vmatpush1.bf16.msra.mxu0 0
        %1153 = vmatprep.subr.bf16.mxu0 0
        %1154 = vmatpush1.bf16.msra.mxu0 0
        %1155 = vmatprep.subr.bf16.mxu0 0
        %1156 = vmatpush1.bf16.msra.mxu0 0
        %1157 = vmatprep.subr.bf16.mxu0 0
        %1158 = vmatpush1.bf16.msra.mxu0 0
        %1159 = vmatprep.mubr.bf16.mxu0 0
        %1160 = vmatmul.mubr.bf16.gmra.mrb[0].mxu0 %v1047
        %v1161 = vpop.f32.mrb[0].mxu0
        %v1162 = vadd.f32 %v540, %v1161
        %v1163 = vpop.f32.mrb[0].mxu0
        %v1164 = vpop.f32.mrb[0].mxu0
        %v1165 = vadd.f32 %v544, %v1164
        %v1166 = vpop.f32.mrb[0].mxu0
        %1167 = vmatprep.mubr.bf16.mxu0 0
        %1168 = vmatmul.mubr.bf16.gmra.mrb[0].mxu0 %v1048
        %v1169 = vpop.f32.mrb[0].mxu0
        %v1170 = vadd.f32 %v550, %v1169
        %v1171 = vpop.f32.mrb[0].mxu0
        %v1172 = vpop.f32.mrb[0].mxu0
        %v1173 = vadd.f32 %v554, %v1172
        %v1174 = vpop.f32.mrb[0].mxu0
        %1175 = vmatprep.mubr.bf16.mxu0 0
        %1176 = vmatmul.mubr.bf16.gmra.mrb[0].mxu0 %v1049
        %v1177 = vpop.f32.mrb[0].mxu0
        %v1178 = vadd.f32 %v560, %v1177
        %v1179 = vpop.f32.mrb[0].mxu0
        %v1180 = vpop.f32.mrb[0].mxu0
        %v1181 = vadd.f32 %v564, %v1180
        %v1182 = vpop.f32.mrb[0].mxu0
        %1183 = vmatprep.mubr.bf16.mxu0 0
        %1184 = vmatmul.mubr.bf16.gmra.mrb[0].mxu0 %v1050
        %v1185 = vpop.f32.mrb[0].mxu0
        %v1186 = vadd.f32 %v570, %v1185
        %v1187 = vpop.f32.mrb[0].mxu0
        %v1188 = vpop.f32.mrb[0].mxu0
        %v1189 = vadd.f32 %v574, %v1188
        %v1190 = vpop.f32.mrb[0].mxu0
        %1191 = vmatprep.mubr.bf16.mxu0 0
        %1192 = vmatmul.mubr.bf16.gmra.mrb[0].mxu0 %v1051
        %v1193 = vpop.f32.mrb[0].mxu0
        %v1194 = vadd.f32 %v580, %v1193
        %v1195 = vpop.f32.mrb[0].mxu0
        %v1196 = vpop.f32.mrb[0].mxu0
        %v1197 = vadd.f32 %v584, %v1196
        %v1198 = vpop.f32.mrb[0].mxu0
        %1199 = vmatprep.mubr.bf16.mxu0 0
        %1200 = vmatmul.mubr.bf16.gmra.mrb[0].mxu0 %v1052
        %v1201 = vpop.f32.mrb[0].mxu0
        %v1202 = vadd.f32 %v590, %v1201
        %v1203 = vpop.f32.mrb[0].mxu0
        %v1204 = vpop.f32.mrb[0].mxu0
        %v1205 = vadd.f32 %v594, %v1204
        %v1206 = vpop.f32.mrb[0].mxu0
        %1207 = vmatprep.mubr.bf16.mxu0 0
        %1208 = vmatmul.mubr.bf16.gmra.mrb[0].mxu0 %v1053
        %v1209 = vpop.f32.mrb[0].mxu0
        %v1210 = vadd.f32 %v600, %v1209
        %v1211 = vpop.f32.mrb[0].mxu0
        %v1212 = vpop.f32.mrb[0].mxu0
        %v1213 = vadd.f32 %v604, %v1212
        %v1214 = vpop.f32.mrb[0].mxu0
        %1215 = vmatprep.mubr.bf16.mxu0 0
        %1216 = vmatmul.mubr.bf16.gmra.mrb[0].mxu0 %v1054
        %v1217 = vpop.f32.mrb[0].mxu0
        %v1218 = vadd.f32 %v610, %v1217
        %v1219 = vpop.f32.mrb[0].mxu0
        %v1220 = vpop.f32.mrb[0].mxu0
        %v1221 = vadd.f32 %v614, %v1220
        %v1222 = vpop.f32.mrb[0].mxu0
        %1223 = vmatprep.mubr.bf16.mxu0 0
        %1224 = vmatmul.mubr.bf16.gmra.mrb[0].mxu0 %v1055
        %v1225 = vpop.f32.mrb[0].mxu0
        %v1226 = vadd.f32 %v620, %v1225
        %v1227 = vpop.f32.mrb[0].mxu0
        %v1228 = vpop.f32.mrb[0].mxu0
        %v1229 = vadd.f32 %v624, %v1228
        %v1230 = vpop.f32.mrb[0].mxu0
        %1231 = vmatprep.mubr.bf16.mxu0 0
        %1232 = vmatmul.mubr.bf16.gmra.mrb[0].mxu0 %v1056
        %v1233 = vpop.f32.mrb[0].mxu0
        %v1234 = vadd.f32 %v630, %v1233
        %v1235 = vpop.f32.mrb[0].mxu0
        %v1236 = vpop.f32.mrb[0].mxu0
        %v1237 = vadd.f32 %v634, %v1236
        %v1238 = vpop.f32.mrb[0].mxu0
        %1239 = vmatprep.mubr.bf16.mxu0 0
        %1240 = vmatmul.mubr.bf16.gmra.mrb[0].mxu0 %v1057
        %v1241 = vpop.f32.mrb[0].mxu0
        %v1242 = vadd.f32 %v640, %v1241
        %v1243 = vpop.f32.mrb[0].mxu0
        %v1244 = vpop.f32.mrb[0].mxu0
        %v1245 = vadd.f32 %v644, %v1244
        %v1246 = vpop.f32.mrb[0].mxu0
        %1247 = vmatprep.mubr.bf16.mxu0 0
        %1248 = vmatmul.mubr.bf16.gmra.mrb[0].mxu0 %v1058
        %v1249 = vpop.f32.mrb[0].mxu0
        %v1250 = vadd.f32 %v650, %v1249
        %v1251 = vpop.f32.mrb[0].mxu0
        %v1252 = vpop.f32.mrb[0].mxu0
        %v1253 = vadd.f32 %v654, %v1252
        %v1254 = vpop.f32.mrb[0].mxu0
        %1255 = vmatprep.mubr.bf16.mxu0 0
        %1256 = vmatmul.mubr.bf16.gmra.mrb[0].mxu0 %v1059
        %v1257 = vpop.f32.mrb[0].mxu0
        %v1258 = vadd.f32 %v660, %v1257
        %v1259 = vpop.f32.mrb[0].mxu0
        %v1260 = vpop.f32.mrb[0].mxu0
        %v1261 = vadd.f32 %v664, %v1260
        %v1262 = vpop.f32.mrb[0].mxu0
        %1263 = vmatprep.mubr.bf16.mxu0 0
        %1264 = vmatmul.mubr.bf16.gmra.mrb[0].mxu0 %v1060
        %v1265 = vpop.f32.mrb[0].mxu0
        %v1266 = vadd.f32 %v670, %v1265
        %v1267 = vpop.f32.mrb[0].mxu0
        %v1268 = vpop.f32.mrb[0].mxu0
        %v1269 = vadd.f32 %v674, %v1268
        %v1270 = vpop.f32.mrb[0].mxu0
        %1271 = vmatprep.mubr.bf16.mxu0 0
        %1272 = vmatmul.mubr.bf16.gmra.mrb[0].mxu0 %v1061
        %v1273 = vpop.f32.mrb[0].mxu0
        %v1274 = vadd.f32 %v680, %v1273
        %v1275 = vpop.f32.mrb[0].mxu0
        %v1276 = vpop.f32.mrb[0].mxu0
        %v1277 = vadd.f32 %v684, %v1276
        %v1278 = vpop.f32.mrb[0].mxu0
        %1279 = vmatprep.mubr.bf16.mxu0 0
        %1280 = vmatmul.mubr.bf16.gmra.mrb[0].mxu0 %v1062
        %v1281 = vpop.f32.mrb[0].mxu0
        %v1282 = vadd.f32 %v690, %v1281
        %v1283 = vpop.f32.mrb[0].mxu0
        %v1284 = vpop.f32.mrb[0].mxu0
        %v1285 = vadd.f32 %v694, %v1284
        %v1286 = vpop.f32.mrb[0].mxu0
        %1287 = vdwg.mxu0
        %v1288 = vld [vmem:[%s6] sm:$0x1]
        %v1290 = vlaneseq
        %v1291 = vshrl.u32 %v1290, 7
        %v1292 = vsub.s32 0, %v1291
        %v1293 = vrot.slane %v1288, %v1292
        %v1295 = vadd.f32 %v1162, %v1293
        %v1296 = vadd.f32 %v1165, %v1293
        %v1297 = vadd.f32 %v1170, %v1293
        %v1298 = vadd.f32 %v1173, %v1293
        %v1299 = vadd.f32 %v1178, %v1293
        %v1300 = vadd.f32 %v1181, %v1293
        %v1301 = vadd.f32 %v1186, %v1293
        %v1302 = vadd.f32 %v1189, %v1293
        %v1303 = vadd.f32 %v1194, %v1293
        %v1304 = vadd.f32 %v1197, %v1293
        %v1305 = vadd.f32 %v1202, %v1293
        %v1306 = vadd.f32 %v1205, %v1293
        %v1307 = vadd.f32 %v1210, %v1293
        %v1308 = vadd.f32 %v1213, %v1293
        %v1309 = vadd.f32 %v1218, %v1293
        %v1310 = vadd.f32 %v1221, %v1293
        %v1311 = vadd.f32 %v1226, %v1293
        %v1312 = vadd.f32 %v1229, %v1293
        %v1313 = vadd.f32 %v1234, %v1293
        %v1314 = vadd.f32 %v1237, %v1293
        %v1315 = vadd.f32 %v1242, %v1293
        %v1316 = vadd.f32 %v1245, %v1293
        %v1317 = vadd.f32 %v1250, %v1293
        %v1318 = vadd.f32 %v1253, %v1293
        %v1319 = vadd.f32 %v1258, %v1293
        %v1320 = vadd.f32 %v1261, %v1293
        %v1321 = vadd.f32 %v1266, %v1293
        %v1322 = vadd.f32 %v1269, %v1293
        %v1323 = vadd.f32 %v1274, %v1293
        %v1324 = vadd.f32 %v1277, %v1293
        %v1325 = vadd.f32 %v1282, %v1293
        %v1326 = vadd.f32 %v1285, %v1293
        %v1327 = vmax.f32 %v1295, 0.0
        %v1328 = vmax.f32 %v1296, 0.0
        %v1329 = vmax.f32 %v1297, 0.0
        %v1330 = vmax.f32 %v1298, 0.0
        %v1331 = vmax.f32 %v1299, 0.0
        %v1332 = vmax.f32 %v1300, 0.0
        %v1333 = vmax.f32 %v1301, 0.0
        %v1334 = vmax.f32 %v1302, 0.0
        %v1335 = vmax.f32 %v1303, 0.0
        %v1336 = vmax.f32 %v1304, 0.0
        %v1337 = vmax.f32 %v1305, 0.0
        %v1338 = vmax.f32 %v1306, 0.0
        %v1339 = vmax.f32 %v1307, 0.0
        %v1340 = vmax.f32 %v1308, 0.0
        %v1341 = vmax.f32 %v1309, 0.0
        %v1342 = vmax.f32 %v1310, 0.0
        %v1343 = vmax.f32 %v1311, 0.0
        %v1344 = vmax.f32 %v1312, 0.0
        %v1345 = vmax.f32 %v1313, 0.0
        %v1346 = vmax.f32 %v1314, 0.0
        %v1347 = vmax.f32 %v1315, 0.0
        %v1348 = vmax.f32 %v1316, 0.0
        %v1349 = vmax.f32 %v1317, 0.0
        %v1350 = vmax.f32 %v1318, 0.0
        %v1351 = vmax.f32 %v1319, 0.0
        %v1352 = vmax.f32 %v1320, 0.0
        %v1353 = vmax.f32 %v1321, 0.0
        %v1354 = vmax.f32 %v1322, 0.0
        %v1355 = vmax.f32 %v1323, 0.0
        %v1356 = vmax.f32 %v1324, 0.0
        %v1357 = vmax.f32 %v1325, 0.0
        %v1358 = vmax.f32 %v1326, 0.0
        %v1359 = vpack.c.bf16 %v1328, %v1327
        %v1360 = vpack.c.bf16 %v1330, %v1329
        %v1361 = vpack.c.bf16 %v1332, %v1331
        %v1362 = vpack.c.bf16 %v1334, %v1333
        %v1363 = vpack.c.bf16 %v1336, %v1335
        %v1364 = vpack.c.bf16 %v1338, %v1337
        %v1365 = vpack.c.bf16 %v1340, %v1339
        %v1366 = vpack.c.bf16 %v1342, %v1341
        %v1367 = vpack.c.bf16 %v1344, %v1343
        %v1368 = vpack.c.bf16 %v1346, %v1345
        %v1369 = vpack.c.bf16 %v1348, %v1347
        %v1370 = vpack.c.bf16 %v1350, %v1349
        %v1371 = vpack.c.bf16 %v1352, %v1351
        %v1372 = vpack.c.bf16 %v1354, %v1353
        %v1373 = vpack.c.bf16 %v1356, %v1355
        %v1374 = vpack.c.bf16 %v1358, %v1357
        %v1375 = vld [vmem:[%s7] sm:$0xf]
        %v1376 = vld [vmem:[%s7 + $0x4] sm:$0xf]
        %v1377 = vld [vmem:[%s7 + $0x8] sm:$0xf]
        %v1378 = vld [vmem:[%s7 + $0xc] sm:$0xf]
        %v1379 = vld [vmem:[%s7 + $0x10] sm:$0xf]
        %v1380 = vld [vmem:[%s7 + $0x14] sm:$0xf]
        %v1381 = vld [vmem:[%s7 + $0x18] sm:$0xf]
        %v1382 = vld [vmem:[%s7 + $0x1c] sm:$0xf]
        %v1383 = vld [vmem:[%s7 + $0x20] sm:$0xf]
        %v1384 = vld [vmem:[%s7 + $0x24] sm:$0xf]
        %v1385 = vld [vmem:[%s7 + $0x28] sm:$0xf]
        %v1386 = vld [vmem:[%s7 + $0x2c] sm:$0xf]
        %v1387 = vld [vmem:[%s7 + $0x30] sm:$0xf]
        %v1388 = vld [vmem:[%s7 + $0x34] sm:$0xf]
        %v1389 = vld [vmem:[%s7 + $0x38] sm:$0xf]
        %v1390 = vld [vmem:[%s7 + $0x3c] sm:$0xf]
        %v1391 = vld [vmem:[%s8] sm:$0x1]
        %v1393 = vlaneseq
        %v1394 = vshrl.u32 %v1393, 7
        %v1395 = vsub.s32 0, %v1394
        %v1396 = vrot.slane %v1391, %v1395
        %v1414 = vunpack.c.l.b16 %v1375
        %v1415 = vunpack.c.l.b16 %v1376
        %v1416 = vunpack.c.l.b16 %v1377
        %v1417 = vunpack.c.l.b16 %v1378
        %v1418 = vunpack.c.l.b16 %v1379
        %v1419 = vunpack.c.l.b16 %v1380
        %v1420 = vunpack.c.l.b16 %v1381
        %v1421 = vunpack.c.l.b16 %v1382
        %v1422 = vunpack.c.l.b16 %v1383
        %v1423 = vunpack.c.l.b16 %v1384
        %v1424 = vunpack.c.l.b16 %v1385
        %v1425 = vunpack.c.l.b16 %v1386
        %v1426 = vunpack.c.l.b16 %v1387
        %v1427 = vunpack.c.l.b16 %v1388
        %v1428 = vunpack.c.l.b16 %v1389
        %v1429 = vunpack.c.l.b16 %v1390
        %v1430 = vpack.c.b16 %v1415, %v1414
        %v1431 = vpack.c.b16 %v1417, %v1416
        %v1432 = vpack.c.b16 %v1419, %v1418
        %v1433 = vpack.c.b16 %v1421, %v1420
        %v1434 = vpack.c.b16 %v1423, %v1422
        %v1435 = vpack.c.b16 %v1425, %v1424
        %v1436 = vpack.c.b16 %v1427, %v1426
        %v1437 = vpack.c.b16 %v1429, %v1428
        %1446 = vmatprep.subr.bf16.mxu0 0
        %1447 = vmatpush1.bf16.msra.mxu0 %v1430
        %1448 = vmatprep.subr.bf16.mxu0 0
        %1449 = vmatpush1.bf16.msra.mxu0 %v1431
        %1450 = vmatprep.subr.bf16.mxu0 0
        %1451 = vmatpush1.bf16.msra.mxu0 %v1432
        %1452 = vmatprep.subr.bf16.mxu0 0
        %1453 = vmatpush1.bf16.msra.mxu0 %v1433
        %1454 = vmatprep.subr.bf16.mxu0 0
        %1455 = vmatpush1.bf16.msra.mxu0 %v1434
        %1456 = vmatprep.subr.bf16.mxu0 0
        %1457 = vmatpush1.bf16.msra.mxu0 %v1435
        %1458 = vmatprep.subr.bf16.mxu0 0
        %1459 = vmatpush1.bf16.msra.mxu0 %v1436
        %1460 = vmatprep.subr.bf16.mxu0 0
        %1461 = vmatpush1.bf16.msra.mxu0 %v1437
        %1462 = vmatprep.subr.bf16.mxu0 0
        %1463 = vmatpush1.bf16.msra.mxu0 0
        %1464 = vmatprep.subr.bf16.mxu0 0
        %1465 = vmatpush1.bf16.msra.mxu0 0
        %1466 = vmatprep.subr.bf16.mxu0 0
        %1467 = vmatpush1.bf16.msra.mxu0 0
        %1468 = vmatprep.subr.bf16.mxu0 0
        %1469 = vmatpush1.bf16.msra.mxu0 0
        %1470 = vmatprep.subr.bf16.mxu0 0
        %1471 = vmatpush1.bf16.msra.mxu0 0
        %1472 = vmatprep.subr.bf16.mxu0 0
        %1473 = vmatpush1.bf16.msra.mxu0 0
        %1474 = vmatprep.subr.bf16.mxu0 0
        %1475 = vmatpush1.bf16.msra.mxu0 0
        %1476 = vmatprep.subr.bf16.mxu0 0
        %1477 = vmatpush1.bf16.msra.mxu0 0
        %1478 = vmatprep.mubr.bf16.mxu0 0
        %1479 = vmatmul.mubr.bf16.gmra.mrb[0].mxu0 %v1359
        %v1480 = vpop.f32.mrb[0].mxu0
        %v1481 = vadd.f32 %v1396, %v1480
        %v1482 = vpop.f32.mrb[0].mxu0
        %v1483 = vpop.f32.mrb[0].mxu0
        %v1484 = vadd.f32 %v1396, %v1483
        %v1485 = vpop.f32.mrb[0].mxu0
        %1486 = vmatprep.mubr.bf16.mxu0 0
        %1487 = vmatmul.mubr.bf16.gmra.mrb[0].mxu0 %v1360
        %v1488 = vpop.f32.mrb[0].mxu0
        %v1489 = vadd.f32 %v1396, %v1488
        %v1490 = vpop.f32.mrb[0].mxu0
        %v1491 = vpop.f32.mrb[0].mxu0
        %v1492 = vadd.f32 %v1396, %v1491
        %v1493 = vpop.f32.mrb[0].mxu0
        %1494 = vmatprep.mubr.bf16.mxu0 0
        %1495 = vmatmul.mubr.bf16.gmra.mrb[0].mxu0 %v1361
        %v1496 = vpop.f32.mrb[0].mxu0
        %v1497 = vadd.f32 %v1396, %v1496
        %v1498 = vpop.f32.mrb[0].mxu0
        %v1499 = vpop.f32.mrb[0].mxu0
        %v1500 = vadd.f32 %v1396, %v1499
        %v1501 = vpop.f32.mrb[0].mxu0
        %1502 = vmatprep.mubr.bf16.mxu0 0
        %1503 = vmatmul.mubr.bf16.gmra.mrb[0].mxu0 %v1362
        %v1504 = vpop.f32.mrb[0].mxu0
        %v1505 = vadd.f32 %v1396, %v1504
        %v1506 = vpop.f32.mrb[0].mxu0
        %v1507 = vpop.f32.mrb[0].mxu0
        %v1508 = vadd.f32 %v1396, %v1507
        %v1509 = vpop.f32.mrb[0].mxu0
        %1510 = vmatprep.mubr.bf16.mxu0 0
        %1511 = vmatmul.mubr.bf16.gmra.mrb[0].mxu0 %v1363
        %v1512 = vpop.f32.mrb[0].mxu0
        %v1513 = vadd.f32 %v1396, %v1512
        %v1514 = vpop.f32.mrb[0].mxu0
        %v1515 = vpop.f32.mrb[0].mxu0
        %v1516 = vadd.f32 %v1396, %v1515
        %v1517 = vpop.f32.mrb[0].mxu0
        %1518 = vmatprep.mubr.bf16.mxu0 0
        %1519 = vmatmul.mubr.bf16.gmra.mrb[0].mxu0 %v1364
        %v1520 = vpop.f32.mrb[0].mxu0
        %v1521 = vadd.f32 %v1396, %v1520
        %v1522 = vpop.f32.mrb[0].mxu0
        %v1523 = vpop.f32.mrb[0].mxu0
        %v1524 = vadd.f32 %v1396, %v1523
        %v1525 = vpop.f32.mrb[0].mxu0
        %1526 = vmatprep.mubr.bf16.mxu0 0
        %1527 = vmatmul.mubr.bf16.gmra.mrb[0].mxu0 %v1365
        %v1528 = vpop.f32.mrb[0].mxu0
        %v1529 = vadd.f32 %v1396, %v1528
        %v1530 = vpop.f32.mrb[0].mxu0
        %v1531 = vpop.f32.mrb[0].mxu0
        %v1532 = vadd.f32 %v1396, %v1531
        %v1533 = vpop.f32.mrb[0].mxu0
        %1534 = vmatprep.mubr.bf16.mxu0 0
        %1535 = vmatmul.mubr.bf16.gmra.mrb[0].mxu0 %v1366
        %v1536 = vpop.f32.mrb[0].mxu0
        %v1537 = vadd.f32 %v1396, %v1536
        %v1538 = vpop.f32.mrb[0].mxu0
        %v1539 = vpop.f32.mrb[0].mxu0
        %v1540 = vadd.f32 %v1396, %v1539
        %v1541 = vpop.f32.mrb[0].mxu0
        %1542 = vmatprep.mubr.bf16.mxu0 0
        %1543 = vmatmul.mubr.bf16.gmra.mrb[0].mxu0 %v1367
        %v1544 = vpop.f32.mrb[0].mxu0
        %v1545 = vadd.f32 %v1396, %v1544
        %v1546 = vpop.f32.mrb[0].mxu0
        %v1547 = vpop.f32.mrb[0].mxu0
        %v1548 = vadd.f32 %v1396, %v1547
        %v1549 = vpop.f32.mrb[0].mxu0
        %1550 = vmatprep.mubr.bf16.mxu0 0
        %1551 = vmatmul.mubr.bf16.gmra.mrb[0].mxu0 %v1368
        %v1552 = vpop.f32.mrb[0].mxu0
        %v1553 = vadd.f32 %v1396, %v1552
        %v1554 = vpop.f32.mrb[0].mxu0
        %v1555 = vpop.f32.mrb[0].mxu0
        %v1556 = vadd.f32 %v1396, %v1555
        %v1557 = vpop.f32.mrb[0].mxu0
        %1558 = vmatprep.mubr.bf16.mxu0 0
        %1559 = vmatmul.mubr.bf16.gmra.mrb[0].mxu0 %v1369
        %v1560 = vpop.f32.mrb[0].mxu0
        %v1561 = vadd.f32 %v1396, %v1560
        %v1562 = vpop.f32.mrb[0].mxu0
        %v1563 = vpop.f32.mrb[0].mxu0
        %v1564 = vadd.f32 %v1396, %v1563
        %v1565 = vpop.f32.mrb[0].mxu0
        %1566 = vmatprep.mubr.bf16.mxu0 0
        %1567 = vmatmul.mubr.bf16.gmra.mrb[0].mxu0 %v1370
        %v1568 = vpop.f32.mrb[0].mxu0
        %v1569 = vadd.f32 %v1396, %v1568
        %v1570 = vpop.f32.mrb[0].mxu0
        %v1571 = vpop.f32.mrb[0].mxu0
        %v1572 = vadd.f32 %v1396, %v1571
        %v1573 = vpop.f32.mrb[0].mxu0
        %1574 = vmatprep.mubr.bf16.mxu0 0
        %1575 = vmatmul.mubr.bf16.gmra.mrb[0].mxu0 %v1371
        %v1576 = vpop.f32.mrb[0].mxu0
        %v1577 = vadd.f32 %v1396, %v1576
        %v1578 = vpop.f32.mrb[0].mxu0
        %v1579 = vpop.f32.mrb[0].mxu0
        %v1580 = vadd.f32 %v1396, %v1579
        %v1581 = vpop.f32.mrb[0].mxu0
        %1582 = vmatprep.mubr.bf16.mxu0 0
        %1583 = vmatmul.mubr.bf16.gmra.mrb[0].mxu0 %v1372
        %v1584 = vpop.f32.mrb[0].mxu0
        %v1585 = vadd.f32 %v1396, %v1584
        %v1586 = vpop.f32.mrb[0].mxu0
        %v1587 = vpop.f32.mrb[0].mxu0
        %v1588 = vadd.f32 %v1396, %v1587
        %v1589 = vpop.f32.mrb[0].mxu0
        %1590 = vmatprep.mubr.bf16.mxu0 0
        %1591 = vmatmul.mubr.bf16.gmra.mrb[0].mxu0 %v1373
        %v1592 = vpop.f32.mrb[0].mxu0
        %v1593 = vadd.f32 %v1396, %v1592
        %v1594 = vpop.f32.mrb[0].mxu0
        %v1595 = vpop.f32.mrb[0].mxu0
        %v1596 = vadd.f32 %v1396, %v1595
        %v1597 = vpop.f32.mrb[0].mxu0
        %1598 = vmatprep.mubr.bf16.mxu0 0
        %1599 = vmatmul.mubr.bf16.gmra.mrb[0].mxu0 %v1374
        %v1600 = vpop.f32.mrb[0].mxu0
        %v1601 = vadd.f32 %v1396, %v1600
        %v1602 = vpop.f32.mrb[0].mxu0
        %v1603 = vpop.f32.mrb[0].mxu0
        %v1604 = vadd.f32 %v1396, %v1603
        %v1605 = vpop.f32.mrb[0].mxu0
        %1606 = vdwg.mxu0
        %v1607 = vmax.f32 %v1481, 0.0
        %v1608 = vmax.f32 %v1484, 0.0
        %v1609 = vmax.f32 %v1489, 0.0
        %v1610 = vmax.f32 %v1492, 0.0
        %v1611 = vmax.f32 %v1497, 0.0
        %v1612 = vmax.f32 %v1500, 0.0
        %v1613 = vmax.f32 %v1505, 0.0
        %v1614 = vmax.f32 %v1508, 0.0
        %v1615 = vmax.f32 %v1513, 0.0
        %v1616 = vmax.f32 %v1516, 0.0
        %v1617 = vmax.f32 %v1521, 0.0
        %v1618 = vmax.f32 %v1524, 0.0
        %v1619 = vmax.f32 %v1529, 0.0
        %v1620 = vmax.f32 %v1532, 0.0
        %v1621 = vmax.f32 %v1537, 0.0
        %v1622 = vmax.f32 %v1540, 0.0
        %v1623 = vmax.f32 %v1545, 0.0
        %v1624 = vmax.f32 %v1548, 0.0
        %v1625 = vmax.f32 %v1553, 0.0
        %v1626 = vmax.f32 %v1556, 0.0
        %v1627 = vmax.f32 %v1561, 0.0
        %v1628 = vmax.f32 %v1564, 0.0
        %v1629 = vmax.f32 %v1569, 0.0
        %v1630 = vmax.f32 %v1572, 0.0
        %v1631 = vmax.f32 %v1577, 0.0
        %v1632 = vmax.f32 %v1580, 0.0
        %v1633 = vmax.f32 %v1585, 0.0
        %v1634 = vmax.f32 %v1588, 0.0
        %v1635 = vmax.f32 %v1593, 0.0
        %v1636 = vmax.f32 %v1596, 0.0
        %v1637 = vmax.f32 %v1601, 0.0
        %v1638 = vmax.f32 %v1604, 0.0
        %v1639 = vpack.c.bf16 %v1608, %v1607
        %v1640 = vpack.c.bf16 %v1610, %v1609
        %v1641 = vpack.c.bf16 %v1612, %v1611
        %v1642 = vpack.c.bf16 %v1614, %v1613
        %v1643 = vpack.c.bf16 %v1616, %v1615
        %v1644 = vpack.c.bf16 %v1618, %v1617
        %v1645 = vpack.c.bf16 %v1620, %v1619
        %v1646 = vpack.c.bf16 %v1622, %v1621
        %v1647 = vpack.c.bf16 %v1624, %v1623
        %v1648 = vpack.c.bf16 %v1626, %v1625
        %v1649 = vpack.c.bf16 %v1628, %v1627
        %v1650 = vpack.c.bf16 %v1630, %v1629
        %v1651 = vpack.c.bf16 %v1632, %v1631
        %v1652 = vpack.c.bf16 %v1634, %v1633
        %v1653 = vpack.c.bf16 %v1636, %v1635
        %v1654 = vpack.c.bf16 %v1638, %v1637
        %v1655 = vld [vmem:[%s9] sm:$0xf]
        %v1656 = vld [vmem:[%s9 + $0x4] sm:$0xf]
        %v1657 = vld [vmem:[%s9 + $0x8] sm:$0xf]
        %v1658 = vld [vmem:[%s9 + $0xc] sm:$0xf]
        %v1659 = vld [vmem:[%s9 + $0x10] sm:$0xf]
        %v1660 = vld [vmem:[%s9 + $0x14] sm:$0xf]
        %v1661 = vld [vmem:[%s9 + $0x18] sm:$0xf]
        %v1662 = vld [vmem:[%s9 + $0x1c] sm:$0xf]
        %v1663 = vld [vmem:[%s9 + $0x20] sm:$0xf]
        %v1664 = vld [vmem:[%s9 + $0x24] sm:$0xf]
        %v1665 = vld [vmem:[%s9 + $0x28] sm:$0xf]
        %v1666 = vld [vmem:[%s9 + $0x2c] sm:$0xf]
        %v1667 = vld [vmem:[%s9 + $0x30] sm:$0xf]
        %v1668 = vld [vmem:[%s9 + $0x34] sm:$0xf]
        %v1669 = vld [vmem:[%s9 + $0x38] sm:$0xf]
        %v1670 = vld [vmem:[%s9 + $0x3c] sm:$0xf]
        %v1671 = vld [vmem:[%s10] sm:$0x1]
        %v1673 = vlaneseq
        %v1674 = vshrl.u32 %v1673, 7
        %v1675 = vsub.s32 0, %v1674
        %v1676 = vrot.slane %v1671, %v1675
        %v1694 = vunpack.c.l.b16 %v1655
        %v1695 = vunpack.c.l.b16 %v1656
        %v1696 = vunpack.c.l.b16 %v1657
        %v1697 = vunpack.c.l.b16 %v1658
        %v1698 = vunpack.c.l.b16 %v1659
        %v1699 = vunpack.c.l.b16 %v1660
        %v1700 = vunpack.c.l.b16 %v1661
        %v1701 = vunpack.c.l.b16 %v1662
        %v1702 = vunpack.c.l.b16 %v1663
        %v1703 = vunpack.c.l.b16 %v1664
        %v1704 = vunpack.c.l.b16 %v1665
        %v1705 = vunpack.c.l.b16 %v1666
        %v1706 = vunpack.c.l.b16 %v1667
        %v1707 = vunpack.c.l.b16 %v1668
        %v1708 = vunpack.c.l.b16 %v1669
        %v1709 = vunpack.c.l.b16 %v1670
        %v1710 = vpack.c.b16 %v1695, %v1694
        %v1711 = vpack.c.b16 %v1697, %v1696
        %v1712 = vpack.c.b16 %v1699, %v1698
        %v1713 = vpack.c.b16 %v1701, %v1700
        %v1714 = vpack.c.b16 %v1703, %v1702
        %v1715 = vpack.c.b16 %v1705, %v1704
        %v1716 = vpack.c.b16 %v1707, %v1706
        %v1717 = vpack.c.b16 %v1709, %v1708
        %1726 = vmatprep.subr.bf16.mxu0 0
        %1727 = vmatpush1.bf16.msra.mxu0 %v1710
        %1728 = vmatprep.subr.bf16.mxu0 0
        %1729 = vmatpush1.bf16.msra.mxu0 %v1711
        %1730 = vmatprep.subr.bf16.mxu0 0
        %1731 = vmatpush1.bf16.msra.mxu0 %v1712
        %1732 = vmatprep.subr.bf16.mxu0 0
        %1733 = vmatpush1.bf16.msra.mxu0 %v1713
        %1734 = vmatprep.subr.bf16.mxu0 0
        %1735 = vmatpush1.bf16.msra.mxu0 %v1714
        %1736 = vmatprep.subr.bf16.mxu0 0
        %1737 = vmatpush1.bf16.msra.mxu0 %v1715
        %1738 = vmatprep.subr.bf16.mxu0 0
        %1739 = vmatpush1.bf16.msra.mxu0 %v1716
        %1740 = vmatprep.subr.bf16.mxu0 0
        %1741 = vmatpush1.bf16.msra.mxu0 %v1717
        %1742 = vmatprep.subr.bf16.mxu0 0
        %1743 = vmatpush1.bf16.msra.mxu0 0
        %1744 = vmatprep.subr.bf16.mxu0 0
        %1745 = vmatpush1.bf16.msra.mxu0 0
        %1746 = vmatprep.subr.bf16.mxu0 0
        %1747 = vmatpush1.bf16.msra.mxu0 0
        %1748 = vmatprep.subr.bf16.mxu0 0
        %1749 = vmatpush1.bf16.msra.mxu0 0
        %1750 = vmatprep.subr.bf16.mxu0 0
        %1751 = vmatpush1.bf16.msra.mxu0 0
        %1752 = vmatprep.subr.bf16.mxu0 0
        %1753 = vmatpush1.bf16.msra.mxu0 0
        %1754 = vmatprep.subr.bf16.mxu0 0
        %1755 = vmatpush1.bf16.msra.mxu0 0
        %1756 = vmatprep.subr.bf16.mxu0 0
        %1757 = vmatpush1.bf16.msra.mxu0 0
        %1758 = vmatprep.mubr.bf16.mxu0 0
        %1759 = vmatmul.mubr.bf16.gmra.mrb[0].mxu0 %v1639
        %v1760 = vpop.f32.mrb[0].mxu0
        %v1761 = vadd.f32 %v1676, %v1760
        %v1762 = vpop.f32.mrb[0].mxu0
        %v1763 = vpop.f32.mrb[0].mxu0
        %v1764 = vadd.f32 %v1676, %v1763
        %v1765 = vpop.f32.mrb[0].mxu0
        %1766 = vmatprep.mubr.bf16.mxu0 0
        %1767 = vmatmul.mubr.bf16.gmra.mrb[0].mxu0 %v1640
        %v1768 = vpop.f32.mrb[0].mxu0
        %v1769 = vadd.f32 %v1676, %v1768
        %v1770 = vpop.f32.mrb[0].mxu0
        %v1771 = vpop.f32.mrb[0].mxu0
        %v1772 = vadd.f32 %v1676, %v1771
        %v1773 = vpop.f32.mrb[0].mxu0
        %1774 = vmatprep.mubr.bf16.mxu0 0
        %1775 = vmatmul.mubr.bf16.gmra.mrb[0].mxu0 %v1641
        %v1776 = vpop.f32.mrb[0].mxu0
        %v1777 = vadd.f32 %v1676, %v1776
        %v1778 = vpop.f32.mrb[0].mxu0
        %v1779 = vpop.f32.mrb[0].mxu0
        %v1780 = vadd.f32 %v1676, %v1779
        %v1781 = vpop.f32.mrb[0].mxu0
        %1782 = vmatprep.mubr.bf16.mxu0 0
        %1783 = vmatmul.mubr.bf16.gmra.mrb[0].mxu0 %v1642
        %v1784 = vpop.f32.mrb[0].mxu0
        %v1785 = vadd.f32 %v1676, %v1784
        %v1786 = vpop.f32.mrb[0].mxu0
        %v1787 = vpop.f32.mrb[0].mxu0
        %v1788 = vadd.f32 %v1676, %v1787
        %v1789 = vpop.f32.mrb[0].mxu0
        %1790 = vmatprep.mubr.bf16.mxu0 0
        %1791 = vmatmul.mubr.bf16.gmra.mrb[0].mxu0 %v1643
        %v1792 = vpop.f32.mrb[0].mxu0
        %v1793 = vadd.f32 %v1676, %v1792
        %v1794 = vpop.f32.mrb[0].mxu0
        %v1795 = vpop.f32.mrb[0].mxu0
        %v1796 = vadd.f32 %v1676, %v1795
        %v1797 = vpop.f32.mrb[0].mxu0
        %1798 = vmatprep.mubr.bf16.mxu0 0
        %1799 = vmatmul.mubr.bf16.gmra.mrb[0].mxu0 %v1644
        %v1800 = vpop.f32.mrb[0].mxu0
        %v1801 = vadd.f32 %v1676, %v1800
        %v1802 = vpop.f32.mrb[0].mxu0
        %v1803 = vpop.f32.mrb[0].mxu0
        %v1804 = vadd.f32 %v1676, %v1803
        %v1805 = vpop.f32.mrb[0].mxu0
        %1806 = vmatprep.mubr.bf16.mxu0 0
        %1807 = vmatmul.mubr.bf16.gmra.mrb[0].mxu0 %v1645
        %v1808 = vpop.f32.mrb[0].mxu0
        %v1809 = vadd.f32 %v1676, %v1808
        %v1810 = vpop.f32.mrb[0].mxu0
        %v1811 = vpop.f32.mrb[0].mxu0
        %v1812 = vadd.f32 %v1676, %v1811
        %v1813 = vpop.f32.mrb[0].mxu0
        %1814 = vmatprep.mubr.bf16.mxu0 0
        %1815 = vmatmul.mubr.bf16.gmra.mrb[0].mxu0 %v1646
        %v1816 = vpop.f32.mrb[0].mxu0
        %v1817 = vadd.f32 %v1676, %v1816
        %v1818 = vpop.f32.mrb[0].mxu0
        %v1819 = vpop.f32.mrb[0].mxu0
        %v1820 = vadd.f32 %v1676, %v1819
        %v1821 = vpop.f32.mrb[0].mxu0
        %1822 = vmatprep.mubr.bf16.mxu0 0
        %1823 = vmatmul.mubr.bf16.gmra.mrb[0].mxu0 %v1647
        %v1824 = vpop.f32.mrb[0].mxu0
        %v1825 = vadd.f32 %v1676, %v1824
        %v1826 = vpop.f32.mrb[0].mxu0
        %v1827 = vpop.f32.mrb[0].mxu0
        %v1828 = vadd.f32 %v1676, %v1827
        %v1829 = vpop.f32.mrb[0].mxu0
        %1830 = vmatprep.mubr.bf16.mxu0 0
        %1831 = vmatmul.mubr.bf16.gmra.mrb[0].mxu0 %v1648
        %v1832 = vpop.f32.mrb[0].mxu0
        %v1833 = vadd.f32 %v1676, %v1832
        %v1834 = vpop.f32.mrb[0].mxu0
        %v1835 = vpop.f32.mrb[0].mxu0
        %v1836 = vadd.f32 %v1676, %v1835
        %v1837 = vpop.f32.mrb[0].mxu0
        %1838 = vmatprep.mubr.bf16.mxu0 0
        %1839 = vmatmul.mubr.bf16.gmra.mrb[0].mxu0 %v1649
        %v1840 = vpop.f32.mrb[0].mxu0
        %v1841 = vadd.f32 %v1676, %v1840
        %v1842 = vpop.f32.mrb[0].mxu0
        %v1843 = vpop.f32.mrb[0].mxu0
        %v1844 = vadd.f32 %v1676, %v1843
        %v1845 = vpop.f32.mrb[0].mxu0
        %1846 = vmatprep.mubr.bf16.mxu0 0
        %1847 = vmatmul.mubr.bf16.gmra.mrb[0].mxu0 %v1650
        %v1848 = vpop.f32.mrb[0].mxu0
        %v1849 = vadd.f32 %v1676, %v1848
        %v1850 = vpop.f32.mrb[0].mxu0
        %v1851 = vpop.f32.mrb[0].mxu0
        %v1852 = vadd.f32 %v1676, %v1851
        %v1853 = vpop.f32.mrb[0].mxu0
        %1854 = vmatprep.mubr.bf16.mxu0 0
        %1855 = vmatmul.mubr.bf16.gmra.mrb[0].mxu0 %v1651
        %v1856 = vpop.f32.mrb[0].mxu0
        %v1857 = vadd.f32 %v1676, %v1856
        %v1858 = vpop.f32.mrb[0].mxu0
        %v1859 = vpop.f32.mrb[0].mxu0
        %v1860 = vadd.f32 %v1676, %v1859
        %v1861 = vpop.f32.mrb[0].mxu0
        %1862 = vmatprep.mubr.bf16.mxu0 0
        %1863 = vmatmul.mubr.bf16.gmra.mrb[0].mxu0 %v1652
        %v1864 = vpop.f32.mrb[0].mxu0
        %v1865 = vadd.f32 %v1676, %v1864
        %v1866 = vpop.f32.mrb[0].mxu0
        %v1867 = vpop.f32.mrb[0].mxu0
        %v1868 = vadd.f32 %v1676, %v1867
        %v1869 = vpop.f32.mrb[0].mxu0
        %1870 = vmatprep.mubr.bf16.mxu0 0
        %1871 = vmatmul.mubr.bf16.gmra.mrb[0].mxu0 %v1653
        %v1872 = vpop.f32.mrb[0].mxu0
        %v1873 = vadd.f32 %v1676, %v1872
        %v1874 = vpop.f32.mrb[0].mxu0
        %v1875 = vpop.f32.mrb[0].mxu0
        %v1876 = vadd.f32 %v1676, %v1875
        %v1877 = vpop.f32.mrb[0].mxu0
        %1878 = vmatprep.mubr.bf16.mxu0 0
        %1879 = vmatmul.mubr.bf16.gmra.mrb[0].mxu0 %v1654
        %v1880 = vpop.f32.mrb[0].mxu0
        %v1881 = vadd.f32 %v1676, %v1880
        %v1882 = vpop.f32.mrb[0].mxu0
        %v1883 = vpop.f32.mrb[0].mxu0
        %v1884 = vadd.f32 %v1676, %v1883
        %v1885 = vpop.f32.mrb[0].mxu0
        %1886 = vdwg.mxu0
        %v1887 = vxor.u32 %v1761, 2147483648
        %v1888 = vxor.u32 %v1764, 2147483648
        %v1889 = vxor.u32 %v1769, 2147483648
        %v1890 = vxor.u32 %v1772, 2147483648
        %v1891 = vxor.u32 %v1777, 2147483648
        %v1892 = vxor.u32 %v1780, 2147483648
        %v1893 = vxor.u32 %v1785, 2147483648
        %v1894 = vxor.u32 %v1788, 2147483648
        %v1895 = vxor.u32 %v1793, 2147483648
        %v1896 = vxor.u32 %v1796, 2147483648
        %v1897 = vxor.u32 %v1801, 2147483648
        %v1898 = vxor.u32 %v1804, 2147483648
        %v1899 = vxor.u32 %v1809, 2147483648
        %v1900 = vxor.u32 %v1812, 2147483648
        %v1901 = vxor.u32 %v1817, 2147483648
        %v1902 = vxor.u32 %v1820, 2147483648
        %v1903 = vxor.u32 %v1825, 2147483648
        %v1904 = vxor.u32 %v1828, 2147483648
        %v1905 = vxor.u32 %v1833, 2147483648
        %v1906 = vxor.u32 %v1836, 2147483648
        %v1907 = vxor.u32 %v1841, 2147483648
        %v1908 = vxor.u32 %v1844, 2147483648
        %v1909 = vxor.u32 %v1849, 2147483648
        %v1910 = vxor.u32 %v1852, 2147483648
        %v1911 = vxor.u32 %v1857, 2147483648
        %v1912 = vxor.u32 %v1860, 2147483648
        %v1913 = vxor.u32 %v1865, 2147483648
        %v1914 = vxor.u32 %v1868, 2147483648
        %v1915 = vxor.u32 %v1873, 2147483648
        %v1916 = vxor.u32 %v1876, 2147483648
        %v1917 = vxor.u32 %v1881, 2147483648
        %v1918 = vxor.u32 %v1884, 2147483648
        %v1919 = vmul.f32 %v1887, 1.442695
        %v1920 = vpow.pop %v1919
        %v1921 = vmul.f32 %v1888, 1.442695
        %v1922 = vpow.pop %v1921
        %v1923 = vmul.f32 %v1889, 1.442695
        %v1924 = vpow.pop %v1923
        %v1925 = vmul.f32 %v1890, 1.442695
        %v1926 = vpow.pop %v1925
        %v1927 = vmul.f32 %v1891, 1.442695
        %v1928 = vpow.pop %v1927
        %v1929 = vmul.f32 %v1892, 1.442695
        %v1930 = vpow.pop %v1929
        %v1931 = vmul.f32 %v1893, 1.442695
        %v1932 = vpow.pop %v1931
        %v1933 = vmul.f32 %v1894, 1.442695
        %v1934 = vpow.pop %v1933
        %v1935 = vmul.f32 %v1895, 1.442695
        %v1936 = vpow.pop %v1935
        %v1937 = vmul.f32 %v1896, 1.442695
        %v1938 = vpow.pop %v1937
        %v1939 = vmul.f32 %v1897, 1.442695
        %v1940 = vpow.pop %v1939
        %v1941 = vmul.f32 %v1898, 1.442695
        %v1942 = vpow.pop %v1941
        %v1943 = vmul.f32 %v1899, 1.442695
        %v1944 = vpow.pop %v1943
        %v1945 = vmul.f32 %v1900, 1.442695
        %v1946 = vpow.pop %v1945
        %v1947 = vmul.f32 %v1901, 1.442695
        %v1948 = vpow.pop %v1947
        %v1949 = vmul.f32 %v1902, 1.442695
        %v1950 = vpow.pop %v1949
        %v1951 = vmul.f32 %v1903, 1.442695
        %v1952 = vpow.pop %v1951
        %v1953 = vmul.f32 %v1904, 1.442695
        %v1954 = vpow.pop %v1953
        %v1955 = vmul.f32 %v1905, 1.442695
        %v1956 = vpow.pop %v1955
        %v1957 = vmul.f32 %v1906, 1.442695
        %v1958 = vpow.pop %v1957
        %v1959 = vmul.f32 %v1907, 1.442695
        %v1960 = vpow.pop %v1959
        %v1961 = vmul.f32 %v1908, 1.442695
        %v1962 = vpow.pop %v1961
        %v1963 = vmul.f32 %v1909, 1.442695
        %v1964 = vpow.pop %v1963
        %v1965 = vmul.f32 %v1910, 1.442695
        %v1966 = vpow.pop %v1965
        %v1967 = vmul.f32 %v1911, 1.442695
        %v1968 = vpow.pop %v1967
        %v1969 = vmul.f32 %v1912, 1.442695
        %v1970 = vpow.pop %v1969
        %v1971 = vmul.f32 %v1913, 1.442695
        %v1972 = vpow.pop %v1971
        %v1973 = vmul.f32 %v1914, 1.442695
        %v1974 = vpow.pop %v1973
        %v1975 = vmul.f32 %v1915, 1.442695
        %v1976 = vpow.pop %v1975
        %v1977 = vmul.f32 %v1916, 1.442695
        %v1978 = vpow.pop %v1977
        %v1979 = vmul.f32 %v1917, 1.442695
        %v1980 = vpow.pop %v1979
        %v1981 = vmul.f32 %v1918, 1.442695
        %v1982 = vpow.pop %v1981
        %v1983 = vadd.f32 %v1920, 1.0
        %v1984 = vadd.f32 %v1922, 1.0
        %v1985 = vadd.f32 %v1924, 1.0
        %v1986 = vadd.f32 %v1926, 1.0
        %v1987 = vadd.f32 %v1928, 1.0
        %v1988 = vadd.f32 %v1930, 1.0
        %v1989 = vadd.f32 %v1932, 1.0
        %v1990 = vadd.f32 %v1934, 1.0
        %v1991 = vadd.f32 %v1936, 1.0
        %v1992 = vadd.f32 %v1938, 1.0
        %v1993 = vadd.f32 %v1940, 1.0
        %v1994 = vadd.f32 %v1942, 1.0
        %v1995 = vadd.f32 %v1944, 1.0
        %v1996 = vadd.f32 %v1946, 1.0
        %v1997 = vadd.f32 %v1948, 1.0
        %v1998 = vadd.f32 %v1950, 1.0
        %v1999 = vadd.f32 %v1952, 1.0
        %v2000 = vadd.f32 %v1954, 1.0
        %v2001 = vadd.f32 %v1956, 1.0
        %v2002 = vadd.f32 %v1958, 1.0
        %v2003 = vadd.f32 %v1960, 1.0
        %v2004 = vadd.f32 %v1962, 1.0
        %v2005 = vadd.f32 %v1964, 1.0
        %v2006 = vadd.f32 %v1966, 1.0
        %v2007 = vadd.f32 %v1968, 1.0
        %v2008 = vadd.f32 %v1970, 1.0
        %v2009 = vadd.f32 %v1972, 1.0
        %v2010 = vadd.f32 %v1974, 1.0
        %v2011 = vadd.f32 %v1976, 1.0
        %v2012 = vadd.f32 %v1978, 1.0
        %v2013 = vadd.f32 %v1980, 1.0
        %v2014 = vadd.f32 %v1982, 1.0
        %v2015 = vrcp.pop %v1983
        %v2016 = vmul.f32 1.0, %v2015
        %v2017 = vrcp.pop %v1984
        %v2018 = vmul.f32 1.0, %v2017
        %v2019 = vrcp.pop %v1985
        %v2020 = vmul.f32 1.0, %v2019
        %v2021 = vrcp.pop %v1986
        %v2022 = vmul.f32 1.0, %v2021
        %v2023 = vrcp.pop %v1987
        %v2024 = vmul.f32 1.0, %v2023
        %v2025 = vrcp.pop %v1988
        %v2026 = vmul.f32 1.0, %v2025
        %v2027 = vrcp.pop %v1989
        %v2028 = vmul.f32 1.0, %v2027
        %v2029 = vrcp.pop %v1990
        %v2030 = vmul.f32 1.0, %v2029
        %v2031 = vrcp.pop %v1991
        %v2032 = vmul.f32 1.0, %v2031
        %v2033 = vrcp.pop %v1992
        %v2034 = vmul.f32 1.0, %v2033
        %v2035 = vrcp.pop %v1993
        %v2036 = vmul.f32 1.0, %v2035
        %v2037 = vrcp.pop %v1994
        %v2038 = vmul.f32 1.0, %v2037
        %v2039 = vrcp.pop %v1995
        %v2040 = vmul.f32 1.0, %v2039
        %v2041 = vrcp.pop %v1996
        %v2042 = vmul.f32 1.0, %v2041
        %v2043 = vrcp.pop %v1997
        %v2044 = vmul.f32 1.0, %v2043
        %v2045 = vrcp.pop %v1998
        %v2046 = vmul.f32 1.0, %v2045
        %v2047 = vrcp.pop %v1999
        %v2048 = vmul.f32 1.0, %v2047
        %v2049 = vrcp.pop %v2000
        %v2050 = vmul.f32 1.0, %v2049
        %v2051 = vrcp.pop %v2001
        %v2052 = vmul.f32 1.0, %v2051
        %v2053 = vrcp.pop %v2002
        %v2054 = vmul.f32 1.0, %v2053
        %v2055 = vrcp.pop %v2003
        %v2056 = vmul.f32 1.0, %v2055
        %v2057 = vrcp.pop %v2004
        %v2058 = vmul.f32 1.0, %v2057
        %v2059 = vrcp.pop %v2005
        %v2060 = vmul.f32 1.0, %v2059
        %v2061 = vrcp.pop %v2006
        %v2062 = vmul.f32 1.0, %v2061
        %v2063 = vrcp.pop %v2007
        %v2064 = vmul.f32 1.0, %v2063
        %v2065 = vrcp.pop %v2008
        %v2066 = vmul.f32 1.0, %v2065
        %v2067 = vrcp.pop %v2009
        %v2068 = vmul.f32 1.0, %v2067
        %v2069 = vrcp.pop %v2010
        %v2070 = vmul.f32 1.0, %v2069
        %v2071 = vrcp.pop %v2011
        %v2072 = vmul.f32 1.0, %v2071
        %v2073 = vrcp.pop %v2012
        %v2074 = vmul.f32 1.0, %v2073
        %v2075 = vrcp.pop %v2013
        %v2076 = vmul.f32 1.0, %v2075
        %v2077 = vrcp.pop %v2014
        %v2078 = vmul.f32 1.0, %v2077
        %2079 = vst [vmem:[%s380] sm:$0xff] %v2016
        %2080 = vst [vmem:[%s380 + $0x8] sm:$0xff] %v2018
        %2081 = vst [vmem:[%s380 + $0x10] sm:$0xff] %v2020
        %2082 = vst [vmem:[%s380 + $0x18] sm:$0xff] %v2022
        %2083 = vst [vmem:[%s380 + $0x20] sm:$0xff] %v2024
        %2084 = vst [vmem:[%s380 + $0x28] sm:$0xff] %v2026
        %2085 = vst [vmem:[%s380 + $0x30] sm:$0xff] %v2028
        %2086 = vst [vmem:[%s380 + $0x38] sm:$0xff] %v2030
        %2087 = vst [vmem:[%s380 + $0x40] sm:$0xff] %v2032
        %2088 = vst [vmem:[%s380 + $0x48] sm:$0xff] %v2034
        %2089 = vst [vmem:[%s380 + $0x50] sm:$0xff] %v2036
        %2090 = vst [vmem:[%s380 + $0x58] sm:$0xff] %v2038
        %2091 = vst [vmem:[%s380 + $0x60] sm:$0xff] %v2040
        %2092 = vst [vmem:[%s380 + $0x68] sm:$0xff] %v2042
        %2093 = vst [vmem:[%s380 + $0x70] sm:$0xff] %v2044
        %2094 = vst [vmem:[%s380 + $0x78] sm:$0xff] %v2046
        %2095 = vst [vmem:[%s380 + $0x80] sm:$0xff] %v2048
        %2096 = vst [vmem:[%s380 + $0x88] sm:$0xff] %v2050
        %2097 = vst [vmem:[%s380 + $0x90] sm:$0xff] %v2052
        %2098 = vst [vmem:[%s380 + $0x98] sm:$0xff] %v2054
        %2099 = vst [vmem:[%s380 + $0xa0] sm:$0xff] %v2056
        %2100 = vst [vmem:[%s380 + $0xa8] sm:$0xff] %v2058
        %2101 = vst [vmem:[%s380 + $0xb0] sm:$0xff] %v2060
        %2102 = vst [vmem:[%s380 + $0xb8] sm:$0xff] %v2062
        %2103 = vst [vmem:[%s380 + $0xc0] sm:$0xff] %v2064
        %2104 = vst [vmem:[%s380 + $0xc8] sm:$0xff] %v2066
        %2105 = vst [vmem:[%s380 + $0xd0] sm:$0xff] %v2068
        %2106 = vst [vmem:[%s380 + $0xd8] sm:$0xff] %v2070
        %2107 = vst [vmem:[%s380 + $0xe0] sm:$0xff] %v2072
        %2108 = vst [vmem:[%s380 + $0xe8] sm:$0xff] %v2074
        %2109 = vst [vmem:[%s380 + $0xf0] sm:$0xff] %v2076
        %2110 = vst [vmem:[%s380 + $0xf8] sm:$0xff] %v2078
        %s2111 = sand.u32 %s269, 1
        %s2112 = scalar_lea.sflag [#allocation3], %s2111
        %s2113 = sand.u32 %s269, 1
        %s2114 = smul.addr %s2113, 256
        %s2115 = scalar_lea.vmem [#allocation2], %s2114
        // Predicated region
        $region65: #{tpu_custom_call.1} parent=63 // pred_check
          %p2116 = pneg %p279
        $region66: #{tpu_custom_call.1} parent=63 // pred_check_branch
          %2118 = sbr.rel (%p2116) target = $region68
        $region67: #{tpu_custom_call.1} parent=63 // pred_region
          %s2119 = smul.u32 32, %s25
          %s2121 = ssub.s32 4096, 4096
          %2122 = vsyncadd %s2112, %s2121
          %s2123 = smul.addr %s2119, 128
          %s2124 = scalar_lea.hbm %s11, %s2123
          %s2125 = sshll.u32 %s2115, 4
          %s2126 = int_to_ptr.vmem [resolvable:$true] %s2125
          %2131 = dma.vmem_to_hbm [thread:$0]  %s2126, 4096, %s2124, %s2112, 128, 128, 8
        $region68: #{tpu_custom_call.1} parent=63 // pred_fallthru
          _
      $region64: #{tpu_custom_call.1} parent=5 // pred_fallthru
        _
      %p2132 = scmp.le.s32.totalorder 2, %s20
      // Predicated region
      $region69: #{tpu_custom_call.1} parent=5 // pred_check
        %p2133 = pneg %p2132
      $region70: #{tpu_custom_call.1} parent=5 // pred_check_branch
        %2135 = sbr.rel (%p2133) target = $region72
      $region71: #{tpu_custom_call.1} parent=5 // pred_region
        %s2136 = ssub.s32 %s20, 2
        // Predicated region
        $region73: #{tpu_custom_call.1} parent=71 // pred_check
          %p2137 = pneg %p285
        $region74: #{tpu_custom_call.1} parent=71 // pred_check_branch
          %2139 = sbr.rel (%p2137) target = $region76
        $region75: #{tpu_custom_call.1} parent=71 // pred_region
          %s2140 = sand.u32 %s270, 1
          %s2141 = scalar_lea.sflag [#allocation3], %s2140
          %s2142 = sand.u32 %s270, 1
          %s2143 = smul.addr %s2142, 256
          %s2144 = scalar_lea.vmem [#allocation2], %s2143
          %2145 = dma.done %s2141, 4096
        $region76: #{tpu_custom_call.1} parent=71 // pred_fallthru
          _
      $region72: #{tpu_custom_call.1} parent=5 // pred_fallthru
        _
    $region6: #{tpu_custom_call.1} parent=1 // loop_footer
      %s24 = sadd.s32 1, %s20
    $region7: #{tpu_custom_call.1} parent=1 // loop_footer_branch
      %19 = sbr.rel target = $region3
    $region8: #{tpu_custom_call.1} parent=1 // loop_exit
      _
    %2146 = vsyncpa [#allocation3], 1
    %s2147 = scalar_lea.sflag [#allocation3], 1
    %2148 = vsyncpa %s2147, 1

</llo_original>
